<compile_context>
chip_gen: v6e
topology: v6e:2x2x1
jax: 0.10.0
libtpu: 0.0.40
codegen_flags: <defaults>
</compile_context>

<pallas_src>
import functools

import jax
import jax.numpy as jnp
import numpy as np
from jax.experimental import pallas as pl

LEAKY_SLOPE = 0.1   # reference uses F.leaky_relu(..., negative_slope=0.1)
BN_EPS = 1e-5       # BN folding assumes eval mode (running statistics)


# ---------------------------------------------------------------------------
# Fused Pallas kernel (whole forward pass; static Python loop over layers)
# ---------------------------------------------------------------------------

def _fused_gnn_kernel(num_layer,
                      x_raw_ref, aplus_ref, bvn_ref, pool_ref,
                      enc_w_ref, w_ref, bias_ref, o_ref):
    """Weight / bias stacking order (must match prepare_kernel_params):
      w_ref  [4L+1, D, D] bf16: lw1_0, lw2_0, ..., lw1_{L-1}, lw2_{L-1},
                                vw1_0, vw2_0, ..., vw1_{L-2}, vw2_{L-2},
                                hw1, hw2, hw3
      bias_ref [4L+2, 1, D] f32: enc_b, then same order as the weights.
    """
    f32 = jnp.float32
    bf16 = jnp.bfloat16
    L = num_layer

    def dot(a, b):
        # bf16 MXU matmul, f32 accumulation.
        return jnp.dot(a.astype(bf16), b.astype(bf16), preferred_element_type=f32)

    aplus = aplus_ref[...]        # [N, N] = I + A  (A[dst, src])
    bvn = bvn_ref[...]            # [N, G] = (I + A) @ P^T
    pool = pool_ref[...]          # [G, N] one-hot pooling

    # node_encoder: Linear(20 -> dim), zero-padded to 32 x 128.
    x = dot(x_raw_ref[...], enc_w_ref[...]) + bias_ref[0]

    # vn_embedding initialized to zeros (nn.init.constant_(..., 0)).
    vn = jnp.zeros((pool.shape[0], x.shape[1]), f32)

    for layer in range(L):
        # GIN aggregation (eps=0) after the vn broadcast:
        #   (I + A)(x + P^T vn) = Aplus @ x + Bvn @ vn  (two independent dots).
        h = dot(aplus, x)
        if layer > 0:             # vn == 0 at layer 0, skip the dead dot
            h = h + dot(bvn, vn)

        # GIN MLP: Linear -> ReLU -> Linear (BatchNorm folded into 2nd Linear),
        # then leaky_relu(0.1). Dropout is identity in eval mode.
        h = jnp.maximum(dot(h, w_ref[2 * layer]) + bias_ref[1 + 2 * layer], 0.0)
        h = dot(h, w_ref[2 * layer + 1]) + bias_ref[2 + 2 * layer]
        x = jnp.where(h > 0.0, h, LEAKY_SLOPE * h)

        if layer < L - 1:
            # vn update: mlp_vn(global_add_pool(x) + vn); both BNs folded.
            hv = dot(pool, x) + vn
            hv = jnp.maximum(
                dot(hv, w_ref[2 * L + 2 * layer]) + bias_ref[1 + 2 * L + 2 * layer],
                0.0)
            vn = jnp.maximum(
                dot(hv, w_ref[2 * L + 2 * layer + 1])
                + bias_ref[2 + 2 * L + 2 * layer], 0.0)

    # head: global_add_pool -> Linear/ReLU/Linear/ReLU/Linear (128-lane padded)
    h = dot(pool, x)
    h = jnp.maximum(dot(h, w_ref[4 * L - 2]) + bias_ref[4 * L - 1], 0.0)
    h = jnp.maximum(dot(h, w_ref[4 * L - 1]) + bias_ref[4 * L], 0.0)
    o_ref[...] = dot(h, w_ref[4 * L]) + bias_ref[4 * L + 1]


# ---------------------------------------------------------------------------
# pallas_call wrapper: single invocation, whole arrays resident in VMEM
# ---------------------------------------------------------------------------

def gnn_virtualnode_forward(kernel_inputs, num_layer, g_pad, out_pad):
    kernel = functools.partial(_fused_gnn_kernel, num_layer)
    out_shape = jax.ShapeDtypeStruct((g_pad, out_pad), jnp.float32)
    # No grid: one kernel invocation, full-array VMEM blocks, no double-buffer.
    return pl.pallas_call(kernel, out_shape=out_shape)(*kernel_inputs)


# ---------------------------------------------------------------------------
# Parameter construction (raw), BN folding, padding, stacking
# ---------------------------------------------------------------------------

def init_raw_params(key, dim, num_layer, out_dim):
    keys = iter(jax.random.split(key, 128))

    def lin(din, dout):
        w = 0.1 * jax.random.normal(next(keys), (din, dout), jnp.float32)
        b = 0.1 * jax.random.normal(next(keys), (dout,), jnp.float32)
        return w, b

    def bn(d):
        gamma = 1.0 + 0.1 * jax.random.normal(next(keys), (d,), jnp.float32)
        beta = 0.1 * jax.random.normal(next(keys), (d,), jnp.float32)
        mean = 0.1 * jax.random.normal(next(keys), (d,), jnp.float32)
        var = jnp.abs(jax.random.normal(next(keys), (d,), jnp.float32)) + 0.5
        return gamma, beta, mean, var

    params = {"enc": lin(20, dim), "layers": [], "mlp_vn": []}
    for _ in range(num_layer):
        params["layers"].append((lin(dim, dim), lin(dim, dim), bn(dim)))
    for _ in range(num_layer - 1):
        params["mlp_vn"].append((lin(dim, dim), bn(dim), lin(dim, dim), bn(dim)))
    params["head"] = (lin(dim, dim // 2), lin(dim // 2, dim // 4),
                      lin(dim // 4, out_dim))
    return params


def _fold_bn_into_linear(w, b, bn_params, eps=BN_EPS):
    # Valid only in eval mode (running statistics) -- assumed throughout.
    gamma, beta, mean, var = bn_params
    scale = gamma / jnp.sqrt(var + eps)
    return w * scale[None, :], b * scale + beta - mean * scale


def _pad_w(w, rows, cols):
    return jnp.zeros((rows, cols), jnp.float32).at[:w.shape[0], :w.shape[1]].set(w)


def _pad_b(b, cols):
    return jnp.zeros((1, cols), jnp.float32).at[0, :b.shape[0]].set(b)


def prepare_kernel_params(raw, d_pad, in_pad):
    """Returns (enc_w_bf16 [in_pad,D], W_bf16 [4L+1,D,D], B_f32 [4L+2,1,D])."""
    enc_w, enc_b = raw["enc"]
    w_list = []
    b_list = [_pad_b(enc_b, d_pad)]

    for (w1, b1), (w2, b2), bnp in raw["layers"]:
        w2f, b2f = _fold_bn_into_linear(w2, b2, bnp)
        w_list += [_pad_w(w1, d_pad, d_pad), _pad_w(w2f, d_pad, d_pad)]
        b_list += [_pad_b(b1, d_pad), _pad_b(b2f, d_pad)]

    for (w1, b1), bn1, (w2, b2), bn2 in raw["mlp_vn"]:
        w1f, b1f = _fold_bn_into_linear(w1, b1, bn1)
        w2f, b2f = _fold_bn_into_linear(w2, b2, bn2)
        w_list += [_pad_w(w1f, d_pad, d_pad), _pad_w(w2f, d_pad, d_pad)]
        b_list += [_pad_b(b1f, d_pad), _pad_b(b2f, d_pad)]

    for (w, b) in raw["head"]:
        w_list.append(_pad_w(w, d_pad, d_pad))
        b_list.append(_pad_b(b, d_pad))

    enc_w_p = _pad_w(enc_w, in_pad, d_pad).astype(jnp.bfloat16)
    w_stack = jnp.stack(w_list).astype(jnp.bfloat16)   # [4L+1, D, D]
    b_stack = jnp.stack(b_list)                        # [4L+2, 1, D] f32
    return enc_w_p, w_stack, b_stack


# ---------------------------------------------------------------------------
# Pure-JAX f32 reference (unpadded, un-folded) for correctness
# ---------------------------------------------------------------------------

def reference_forward(raw, x_raw, adj, pool, num_layer, dim):
    def bn_apply(h, bnp):
        gamma, beta, mean, var = bnp
        return (h - mean) / jnp.sqrt(var + BN_EPS) * gamma + beta

    enc_w, enc_b = raw["enc"]
    x = x_raw @ enc_w + enc_b
    vn = jnp.zeros((pool.shape[0], dim), jnp.float32)
    poolT = pool.T
    for layer in range(num_layer):
        x = x + poolT @ vn
        h = x + adj @ x
        (w1, b1), (w2, b2), bnp = raw["layers"][layer]
        h = jnp.maximum(h @ w1 + b1, 0.0)
        h = bn_apply(h @ w2 + b2, bnp)
        x = jnp.where(h > 0.0, h, LEAKY_SLOPE * h)
        if layer < num_layer - 1:
            (vw1, vb1), bn1, (vw2, vb2), bn2 = raw["mlp_vn"][layer]
            hv = pool @ x + vn
            hv = jnp.maximum(bn_apply(hv @ vw1 + vb1, bn1), 0.0)
            vn = jnp.maximum(bn_apply(hv @ vw2 + vb2, bn2), 0.0)
    pooled = pool @ x
    (hw1, hb1), (hw2, hb2), (hw3, hb3) = raw["head"]
    h = jnp.maximum(pooled @ hw1 + hb1, 0.0)
    h = jnp.maximum(h @ hw2 + hb2, 0.0)
    return h @ hw3 + hb3


# ---------------------------------------------------------------------------
# Example run
# ---------------------------------------------------------------------------

if __name__ == "__main__":
    # config: atom_dim=32, num_layer=3, local_gnn_type='gin', dropout inactive (eval)
    DIM = 32
    NUM_LAYER = 3
    OUT_DIM = 11
    N_NODES = 64          # 2 graphs x 32 nodes
    N_GRAPHS = 2
    N_EDGES = 160

    # Lane/sublane-dense padded sizes. Padding is exact zeros -> results unchanged.
    #   D_PAD   : feature dim 32 -> 128 lanes
    #   IN_PAD  : encoder input 20 -> 32 (sublane-aligned contraction dim)
    #   N_PAD   : node rows 64 (already a multiple of 8 -> no padding)
    #   G_PAD   : graph rows 2 -> 8 sublanes
    #   OUT_PAD : head output 11 -> 128 lanes
    D_PAD, IN_PAD, N_PAD, G_PAD, OUT_PAD = 128, 32, 64, 8, 128

    key = jax.random.PRNGKey(0)
    k_feat, k_src, k_dst, k_par = jax.random.split(key, 4)

    # Pre-encoded 20-dim node features (stand-in for WavePE encoder output).
    x_raw = jax.random.normal(k_feat, (N_NODES, 20), jnp.float32)

    # Graph membership: first 32 nodes -> graph 0, rest -> graph 1.
    batch_vec = jnp.concatenate(
        [jnp.zeros((32,), jnp.int32), jnp.ones((32,), jnp.int32)])

    # Random intra-graph edges (src -> dst).
    src0 = jax.random.randint(k_src, (N_EDGES // 2,), 0, 32)
    dst0 = jax.random.randint(k_dst, (N_EDGES // 2,), 0, 32)
    src1 = jax.random.randint(k_src, (N_EDGES // 2,), 32, 64)
    dst1 = jax.random.randint(k_dst, (N_EDGES // 2,), 32, 64)
    src = jnp.concatenate([src0, src1])
    dst = jnp.concatenate([dst0, dst1])

    # Dense adjacency A[dst, src]; one-hot pooling matrix [G, N].
    adj_real = jnp.zeros((N_NODES, N_NODES), jnp.float32).at[dst, src].add(1.0)
    pool_real = (batch_vec[None, :] ==
                 jnp.arange(N_GRAPHS)[:, None]).astype(jnp.float32)

    # Zero-padded kernel operands.
    x_raw_p = jnp.zeros((N_PAD, IN_PAD), jnp.float32).at[:N_NODES, :20].set(x_raw)
    aplus_p = (jnp.zeros((N_PAD, N_PAD), jnp.float32)
               .at[:N_NODES, :N_NODES].set(adj_real)
               .at[jnp.arange(N_NODES), jnp.arange(N_NODES)].add(1.0))  # I + A
    pool_p = jnp.zeros((G_PAD, N_PAD), jnp.float32).at[:N_GRAPHS, :N_NODES].set(pool_real)
    bvn_p = aplus_p @ pool_p.T            # [N_PAD, G_PAD]; padded-graph cols are 0

    raw_params = init_raw_params(k_par, DIM, NUM_LAYER, OUT_DIM)
    enc_w_p, w_stack, b_stack = prepare_kernel_params(raw_params, D_PAD, IN_PAD)

    kernel_inputs = (x_raw_p, aplus_p, bvn_p, pool_p, enc_w_p, w_stack, b_stack)

    out_padded = gnn_virtualnode_forward(kernel_inputs, NUM_LAYER, G_PAD, OUT_PAD)
    out_padded = jax.block_until_ready(out_padded)
    out = out_padded[:N_GRAPHS, :OUT_DIM]

    ref = reference_forward(raw_params, x_raw, adj_real, pool_real, NUM_LAYER, DIM)

    assert out.shape == (N_GRAPHS, OUT_DIM)
    assert bool(jnp.all(jnp.isfinite(out)))
    # Tolerance relaxed vs. the all-f32 build because the kernel now runs its
    # matmuls with bf16 operands (f32 accumulation) per the perf review.
    np.testing.assert_allclose(np.asarray(out), np.asarray(ref),
                               rtol=5e-2, atol=5e-2)
    print("KERNEL_OK")
</pallas_src>

<mosaic_0001>
module attributes {stable_mosaic.version = 11 : i64} {
  func.func @_fused_gnn_kernel(%arg0: memref<64x32xf32, #tpu.memory_space<vmem>>, %arg1: memref<64x64xf32, #tpu.memory_space<vmem>>, %arg2: memref<64x8xf32, #tpu.memory_space<vmem>>, %arg3: memref<8x64xf32, #tpu.memory_space<vmem>>, %arg4: memref<32x128xbf16, #tpu.memory_space<vmem>>, %arg5: memref<13x128x128xbf16, #tpu.memory_space<vmem>>, %arg6: memref<14x1x128xf32, #tpu.memory_space<vmem>>, %arg7: memref<8x128xf32, #tpu.memory_space<vmem>>) attributes {dimension_semantics = [], scalar_prefetch = 0 : i64, scratch_operands = 0 : i64, tpu.core_type = #tpu.core_type<tc>} {
    %c0 = arith.constant 0 : index
    %c0_0 = arith.constant 0 : index
    %0 = vector.load %arg1[%c0, %c0_0] : memref<64x64xf32, #tpu.memory_space<vmem>>, vector<64x64xf32>
    %c0_1 = arith.constant 0 : index
    %c0_2 = arith.constant 0 : index
    %1 = vector.load %arg2[%c0_1, %c0_2] : memref<64x8xf32, #tpu.memory_space<vmem>>, vector<64x8xf32>
    %c0_3 = arith.constant 0 : index
    %c0_4 = arith.constant 0 : index
    %2 = vector.load %arg3[%c0_3, %c0_4] : memref<8x64xf32, #tpu.memory_space<vmem>>, vector<8x64xf32>
    %c0_5 = arith.constant 0 : index
    %c0_6 = arith.constant 0 : index
    %3 = vector.load %arg0[%c0_5, %c0_6] : memref<64x32xf32, #tpu.memory_space<vmem>>, vector<64x32xf32>
    %c0_7 = arith.constant 0 : index
    %c0_8 = arith.constant 0 : index
    %4 = vector.load %arg4[%c0_7, %c0_8] : memref<32x128xbf16, #tpu.memory_space<vmem>>, vector<32x128xbf16>
    %5 = arith.truncf %3 : vector<64x32xf32> to vector<64x32xbf16>
    %cst = arith.constant dense<0.000000e+00> : vector<64x128xf32>
    %6 = tpu.matmul %5, %4, %cst {dimension_numbers = #tpu.dot_dimension_numbers<[1], [0], [0], [1], [0, 0, 1, 1], [], []>} : vector<64x32xbf16>, vector<32x128xbf16>, vector<64x128xf32> -> vector<64x128xf32>
    %c0_9 = arith.constant 0 : index
    %c0_10 = arith.constant 0 : index
    %c0_11 = arith.constant 0 : index
    %7 = vector.load %arg6[%c0_9, %c0_10, %c0_11] : memref<14x1x128xf32, #tpu.memory_space<vmem>>, vector<1x1x128xf32>
    %8 = vector.shape_cast %7 : vector<1x1x128xf32> to vector<1x128xf32>
    %9 = vector.broadcast %8 : vector<1x128xf32> to vector<64x128xf32>
    %10 = arith.addf %6, %9 : vector<64x128xf32>
    %cst_12 = arith.constant 0.000000e+00 : f32
    %11 = vector.broadcast %cst_12 : f32 to vector<8x128xf32>
    %12 = arith.truncf %0 : vector<64x64xf32> to vector<64x64xbf16>
    %13 = arith.truncf %10 : vector<64x128xf32> to vector<64x128xbf16>
    %cst_13 = arith.constant dense<0.000000e+00> : vector<64x128xf32>
    %14 = tpu.matmul %12, %13, %cst_13 {dimension_numbers = #tpu.dot_dimension_numbers<[1], [0], [0], [1], [0, 0, 1, 1], [], []>} : vector<64x64xbf16>, vector<64x128xbf16>, vector<64x128xf32> -> vector<64x128xf32>
    %c0_14 = arith.constant 0 : index
    %c0_15 = arith.constant 0 : index
    %c0_16 = arith.constant 0 : index
    %15 = vector.load %arg5[%c0_14, %c0_15, %c0_16] : memref<13x128x128xbf16, #tpu.memory_space<vmem>>, vector<1x128x128xbf16>
    %16 = vector.shape_cast %15 : vector<1x128x128xbf16> to vector<128x128xbf16>
    %17 = arith.truncf %14 : vector<64x128xf32> to vector<64x128xbf16>
    %cst_17 = arith.constant dense<0.000000e+00> : vector<64x128xf32>
    %18 = tpu.matmul %17, %16, %cst_17 {dimension_numbers = #tpu.dot_dimension_numbers<[1], [0], [0], [1], [0, 0, 1, 1], [], []>} : vector<64x128xbf16>, vector<128x128xbf16>, vector<64x128xf32> -> vector<64x128xf32>
    %c1 = arith.constant 1 : index
    %c0_18 = arith.constant 0 : index
    %c0_19 = arith.constant 0 : index
    %19 = vector.load %arg6[%c1, %c0_18, %c0_19] : memref<14x1x128xf32, #tpu.memory_space<vmem>>, vector<1x1x128xf32>
    %20 = vector.shape_cast %19 : vector<1x1x128xf32> to vector<1x128xf32>
    %21 = vector.broadcast %20 : vector<1x128xf32> to vector<64x128xf32>
    %22 = arith.addf %18, %21 : vector<64x128xf32>
    %cst_20 = arith.constant 0.000000e+00 : f32
    %23 = vector.broadcast %cst_20 : f32 to vector<64x128xf32>
    %24 = arith.maximumf %22, %23 : vector<64x128xf32>
    %c1_21 = arith.constant 1 : index
    %c0_22 = arith.constant 0 : index
    %c0_23 = arith.constant 0 : index
    %25 = vector.load %arg5[%c1_21, %c0_22, %c0_23] : memref<13x128x128xbf16, #tpu.memory_space<vmem>>, vector<1x128x128xbf16>
    %26 = vector.shape_cast %25 : vector<1x128x128xbf16> to vector<128x128xbf16>
    %27 = arith.truncf %24 : vector<64x128xf32> to vector<64x128xbf16>
    %cst_24 = arith.constant dense<0.000000e+00> : vector<64x128xf32>
    %28 = tpu.matmul %27, %26, %cst_24 {dimension_numbers = #tpu.dot_dimension_numbers<[1], [0], [0], [1], [0, 0, 1, 1], [], []>} : vector<64x128xbf16>, vector<128x128xbf16>, vector<64x128xf32> -> vector<64x128xf32>
    %c2 = arith.constant 2 : index
    %c0_25 = arith.constant 0 : index
    %c0_26 = arith.constant 0 : index
    %29 = vector.load %arg6[%c2, %c0_25, %c0_26] : memref<14x1x128xf32, #tpu.memory_space<vmem>>, vector<1x1x128xf32>
    %30 = vector.shape_cast %29 : vector<1x1x128xf32> to vector<1x128xf32>
    %31 = vector.broadcast %30 : vector<1x128xf32> to vector<64x128xf32>
    %32 = arith.addf %28, %31 : vector<64x128xf32>
    %cst_27 = arith.constant 0.000000e+00 : f32
    %33 = vector.broadcast %cst_27 : f32 to vector<64x128xf32>
    %34 = arith.cmpf ogt, %32, %33 : vector<64x128xf32>
    %cst_28 = arith.constant 1.000000e-01 : f32
    %35 = vector.broadcast %cst_28 : f32 to vector<64x128xf32>
    %36 = arith.mulf %35, %32 : vector<64x128xf32>
    %37 = arith.select %34, %32, %36 : vector<64x128xi1>, vector<64x128xf32>
    %38 = arith.truncf %2 : vector<8x64xf32> to vector<8x64xbf16>
    %39 = arith.truncf %37 : vector<64x128xf32> to vector<64x128xbf16>
    %cst_29 = arith.constant dense<0.000000e+00> : vector<8x128xf32>
    %40 = tpu.matmul %38, %39, %cst_29 {dimension_numbers = #tpu.dot_dimension_numbers<[1], [0], [0], [1], [0, 0, 1, 1], [], []>} : vector<8x64xbf16>, vector<64x128xbf16>, vector<8x128xf32> -> vector<8x128xf32>
    %41 = arith.addf %40, %11 : vector<8x128xf32>
    %c6 = arith.constant 6 : index
    %c0_30 = arith.constant 0 : index
    %c0_31 = arith.constant 0 : index
    %42 = vector.load %arg5[%c6, %c0_30, %c0_31] : memref<13x128x128xbf16, #tpu.memory_space<vmem>>, vector<1x128x128xbf16>
    %43 = vector.shape_cast %42 : vector<1x128x128xbf16> to vector<128x128xbf16>
    %44 = arith.truncf %41 : vector<8x128xf32> to vector<8x128xbf16>
    %cst_32 = arith.constant dense<0.000000e+00> : vector<8x128xf32>
    %45 = tpu.matmul %44, %43, %cst_32 {dimension_numbers = #tpu.dot_dimension_numbers<[1], [0], [0], [1], [0, 0, 1, 1], [], []>} : vector<8x128xbf16>, vector<128x128xbf16>, vector<8x128xf32> -> vector<8x128xf32>
    %c7 = arith.constant 7 : index
    %c0_33 = arith.constant 0 : index
    %c0_34 = arith.constant 0 : index
    %46 = vector.load %arg6[%c7, %c0_33, %c0_34] : memref<14x1x128xf32, #tpu.memory_space<vmem>>, vector<1x1x128xf32>
    %47 = vector.shape_cast %46 : vector<1x1x128xf32> to vector<1x128xf32>
    %48 = vector.broadcast %47 : vector<1x128xf32> to vector<8x128xf32>
    %49 = arith.addf %45, %48 : vector<8x128xf32>
    %cst_35 = arith.constant 0.000000e+00 : f32
    %50 = vector.broadcast %cst_35 : f32 to vector<8x128xf32>
    %51 = arith.maximumf %49, %50 : vector<8x128xf32>
    %c7_36 = arith.constant 7 : index
    %c0_37 = arith.constant 0 : index
    %c0_38 = arith.constant 0 : index
    %52 = vector.load %arg5[%c7_36, %c0_37, %c0_38] : memref<13x128x128xbf16, #tpu.memory_space<vmem>>, vector<1x128x128xbf16>
    %53 = vector.shape_cast %52 : vector<1x128x128xbf16> to vector<128x128xbf16>
    %54 = arith.truncf %51 : vector<8x128xf32> to vector<8x128xbf16>
    %cst_39 = arith.constant dense<0.000000e+00> : vector<8x128xf32>
    %55 = tpu.matmul %54, %53, %cst_39 {dimension_numbers = #tpu.dot_dimension_numbers<[1], [0], [0], [1], [0, 0, 1, 1], [], []>} : vector<8x128xbf16>, vector<128x128xbf16>, vector<8x128xf32> -> vector<8x128xf32>
    %c8 = arith.constant 8 : index
    %c0_40 = arith.constant 0 : index
    %c0_41 = arith.constant 0 : index
    %56 = vector.load %arg6[%c8, %c0_40, %c0_41] : memref<14x1x128xf32, #tpu.memory_space<vmem>>, vector<1x1x128xf32>
    %57 = vector.shape_cast %56 : vector<1x1x128xf32> to vector<1x128xf32>
    %58 = vector.broadcast %57 : vector<1x128xf32> to vector<8x128xf32>
    %59 = arith.addf %55, %58 : vector<8x128xf32>
    %cst_42 = arith.constant 0.000000e+00 : f32
    %60 = vector.broadcast %cst_42 : f32 to vector<8x128xf32>
    %61 = arith.maximumf %59, %60 : vector<8x128xf32>
    %62 = arith.truncf %0 : vector<64x64xf32> to vector<64x64xbf16>
    %63 = arith.truncf %37 : vector<64x128xf32> to vector<64x128xbf16>
    %cst_43 = arith.constant dense<0.000000e+00> : vector<64x128xf32>
    %64 = tpu.matmul %62, %63, %cst_43 {dimension_numbers = #tpu.dot_dimension_numbers<[1], [0], [0], [1], [0, 0, 1, 1], [], []>} : vector<64x64xbf16>, vector<64x128xbf16>, vector<64x128xf32> -> vector<64x128xf32>
    %65 = arith.truncf %1 : vector<64x8xf32> to vector<64x8xbf16>
    %66 = arith.truncf %61 : vector<8x128xf32> to vector<8x128xbf16>
    %cst_44 = arith.constant dense<0.000000e+00> : vector<64x128xf32>
    %67 = tpu.matmul %65, %66, %cst_44 {dimension_numbers = #tpu.dot_dimension_numbers<[1], [0], [0], [1], [0, 0, 1, 1], [], []>} : vector<64x8xbf16>, vector<8x128xbf16>, vector<64x128xf32> -> vector<64x128xf32>
    %68 = arith.addf %64, %67 : vector<64x128xf32>
    %c2_45 = arith.constant 2 : index
    %c0_46 = arith.constant 0 : index
    %c0_47 = arith.constant 0 : index
    %69 = vector.load %arg5[%c2_45, %c0_46, %c0_47] : memref<13x128x128xbf16, #tpu.memory_space<vmem>>, vector<1x128x128xbf16>
    %70 = vector.shape_cast %69 : vector<1x128x128xbf16> to vector<128x128xbf16>
    %71 = arith.truncf %68 : vector<64x128xf32> to vector<64x128xbf16>
    %cst_48 = arith.constant dense<0.000000e+00> : vector<64x128xf32>
    %72 = tpu.matmul %71, %70, %cst_48 {dimension_numbers = #tpu.dot_dimension_numbers<[1], [0], [0], [1], [0, 0, 1, 1], [], []>} : vector<64x128xbf16>, vector<128x128xbf16>, vector<64x128xf32> -> vector<64x128xf32>
    %c3 = arith.constant 3 : index
    %c0_49 = arith.constant 0 : index
    %c0_50 = arith.constant 0 : index
    %73 = vector.load %arg6[%c3, %c0_49, %c0_50] : memref<14x1x128xf32, #tpu.memory_space<vmem>>, vector<1x1x128xf32>
    %74 = vector.shape_cast %73 : vector<1x1x128xf32> to vector<1x128xf32>
    %75 = vector.broadcast %74 : vector<1x128xf32> to vector<64x128xf32>
    %76 = arith.addf %72, %75 : vector<64x128xf32>
    %cst_51 = arith.constant 0.000000e+00 : f32
    %77 = vector.broadcast %cst_51 : f32 to vector<64x128xf32>
    %78 = arith.maximumf %76, %77 : vector<64x128xf32>
    %c3_52 = arith.constant 3 : index
    %c0_53 = arith.constant 0 : index
    %c0_54 = arith.constant 0 : index
    %79 = vector.load %arg5[%c3_52, %c0_53, %c0_54] : memref<13x128x128xbf16, #tpu.memory_space<vmem>>, vector<1x128x128xbf16>
    %80 = vector.shape_cast %79 : vector<1x128x128xbf16> to vector<128x128xbf16>
    %81 = arith.truncf %78 : vector<64x128xf32> to vector<64x128xbf16>
    %cst_55 = arith.constant dense<0.000000e+00> : vector<64x128xf32>
    %82 = tpu.matmul %81, %80, %cst_55 {dimension_numbers = #tpu.dot_dimension_numbers<[1], [0], [0], [1], [0, 0, 1, 1], [], []>} : vector<64x128xbf16>, vector<128x128xbf16>, vector<64x128xf32> -> vector<64x128xf32>
    %c4 = arith.constant 4 : index
    %c0_56 = arith.constant 0 : index
    %c0_57 = arith.constant 0 : index
    %83 = vector.load %arg6[%c4, %c0_56, %c0_57] : memref<14x1x128xf32, #tpu.memory_space<vmem>>, vector<1x1x128xf32>
    %84 = vector.shape_cast %83 : vector<1x1x128xf32> to vector<1x128xf32>
    %85 = vector.broadcast %84 : vector<1x128xf32> to vector<64x128xf32>
    %86 = arith.addf %82, %85 : vector<64x128xf32>
    %cst_58 = arith.constant 0.000000e+00 : f32
    %87 = vector.broadcast %cst_58 : f32 to vector<64x128xf32>
    %88 = arith.cmpf ogt, %86, %87 : vector<64x128xf32>
    %cst_59 = arith.constant 1.000000e-01 : f32
    %89 = vector.broadcast %cst_59 : f32 to vector<64x128xf32>
    %90 = arith.mulf %89, %86 : vector<64x128xf32>
    %91 = arith.select %88, %86, %90 : vector<64x128xi1>, vector<64x128xf32>
    %92 = arith.truncf %2 : vector<8x64xf32> to vector<8x64xbf16>
    %93 = arith.truncf %91 : vector<64x128xf32> to vector<64x128xbf16>
    %cst_60 = arith.constant dense<0.000000e+00> : vector<8x128xf32>
    %94 = tpu.matmul %92, %93, %cst_60 {dimension_numbers = #tpu.dot_dimension_numbers<[1], [0], [0], [1], [0, 0, 1, 1], [], []>} : vector<8x64xbf16>, vector<64x128xbf16>, vector<8x128xf32> -> vector<8x128xf32>
    %95 = arith.addf %94, %61 : vector<8x128xf32>
    %c8_61 = arith.constant 8 : index
    %c0_62 = arith.constant 0 : index
    %c0_63 = arith.constant 0 : index
    %96 = vector.load %arg5[%c8_61, %c0_62, %c0_63] : memref<13x128x128xbf16, #tpu.memory_space<vmem>>, vector<1x128x128xbf16>
    %97 = vector.shape_cast %96 : vector<1x128x128xbf16> to vector<128x128xbf16>
    %98 = arith.truncf %95 : vector<8x128xf32> to vector<8x128xbf16>
    %cst_64 = arith.constant dense<0.000000e+00> : vector<8x128xf32>
    %99 = tpu.matmul %98, %97, %cst_64 {dimension_numbers = #tpu.dot_dimension_numbers<[1], [0], [0], [1], [0, 0, 1, 1], [], []>} : vector<8x128xbf16>, vector<128x128xbf16>, vector<8x128xf32> -> vector<8x128xf32>
    %c9 = arith.constant 9 : index
    %c0_65 = arith.constant 0 : index
    %c0_66 = arith.constant 0 : index
    %100 = vector.load %arg6[%c9, %c0_65, %c0_66] : memref<14x1x128xf32, #tpu.memory_space<vmem>>, vector<1x1x128xf32>
    %101 = vector.shape_cast %100 : vector<1x1x128xf32> to vector<1x128xf32>
    %102 = vector.broadcast %101 : vector<1x128xf32> to vector<8x128xf32>
    %103 = arith.addf %99, %102 : vector<8x128xf32>
    %cst_67 = arith.constant 0.000000e+00 : f32
    %104 = vector.broadcast %cst_67 : f32 to vector<8x128xf32>
    %105 = arith.maximumf %103, %104 : vector<8x128xf32>
    %c9_68 = arith.constant 9 : index
    %c0_69 = arith.constant 0 : index
    %c0_70 = arith.constant 0 : index
    %106 = vector.load %arg5[%c9_68, %c0_69, %c0_70] : memref<13x128x128xbf16, #tpu.memory_space<vmem>>, vector<1x128x128xbf16>
    %107 = vector.shape_cast %106 : vector<1x128x128xbf16> to vector<128x128xbf16>
    %108 = arith.truncf %105 : vector<8x128xf32> to vector<8x128xbf16>
    %cst_71 = arith.constant dense<0.000000e+00> : vector<8x128xf32>
    %109 = tpu.matmul %108, %107, %cst_71 {dimension_numbers = #tpu.dot_dimension_numbers<[1], [0], [0], [1], [0, 0, 1, 1], [], []>} : vector<8x128xbf16>, vector<128x128xbf16>, vector<8x128xf32> -> vector<8x128xf32>
    %c10 = arith.constant 10 : index
    %c0_72 = arith.constant 0 : index
    %c0_73 = arith.constant 0 : index
    %110 = vector.load %arg6[%c10, %c0_72, %c0_73] : memref<14x1x128xf32, #tpu.memory_space<vmem>>, vector<1x1x128xf32>
    %111 = vector.shape_cast %110 : vector<1x1x128xf32> to vector<1x128xf32>
    %112 = vector.broadcast %111 : vector<1x128xf32> to vector<8x128xf32>
    %113 = arith.addf %109, %112 : vector<8x128xf32>
    %cst_74 = arith.constant 0.000000e+00 : f32
    %114 = vector.broadcast %cst_74 : f32 to vector<8x128xf32>
    %115 = arith.maximumf %113, %114 : vector<8x128xf32>
    %116 = arith.truncf %0 : vector<64x64xf32> to vector<64x64xbf16>
    %117 = arith.truncf %91 : vector<64x128xf32> to vector<64x128xbf16>
    %cst_75 = arith.constant dense<0.000000e+00> : vector<64x128xf32>
    %118 = tpu.matmul %116, %117, %cst_75 {dimension_numbers = #tpu.dot_dimension_numbers<[1], [0], [0], [1], [0, 0, 1, 1], [], []>} : vector<64x64xbf16>, vector<64x128xbf16>, vector<64x128xf32> -> vector<64x128xf32>
    %119 = arith.truncf %1 : vector<64x8xf32> to vector<64x8xbf16>
    %120 = arith.truncf %115 : vector<8x128xf32> to vector<8x128xbf16>
    %cst_76 = arith.constant dense<0.000000e+00> : vector<64x128xf32>
    %121 = tpu.matmul %119, %120, %cst_76 {dimension_numbers = #tpu.dot_dimension_numbers<[1], [0], [0], [1], [0, 0, 1, 1], [], []>} : vector<64x8xbf16>, vector<8x128xbf16>, vector<64x128xf32> -> vector<64x128xf32>
    %122 = arith.addf %118, %121 : vector<64x128xf32>
    %c4_77 = arith.constant 4 : index
    %c0_78 = arith.constant 0 : index
    %c0_79 = arith.constant 0 : index
    %123 = vector.load %arg5[%c4_77, %c0_78, %c0_79] : memref<13x128x128xbf16, #tpu.memory_space<vmem>>, vector<1x128x128xbf16>
    %124 = vector.shape_cast %123 : vector<1x128x128xbf16> to vector<128x128xbf16>
    %125 = arith.truncf %122 : vector<64x128xf32> to vector<64x128xbf16>
    %cst_80 = arith.constant dense<0.000000e+00> : vector<64x128xf32>
    %126 = tpu.matmul %125, %124, %cst_80 {dimension_numbers = #tpu.dot_dimension_numbers<[1], [0], [0], [1], [0, 0, 1, 1], [], []>} : vector<64x128xbf16>, vector<128x128xbf16>, vector<64x128xf32> -> vector<64x128xf32>
    %c5 = arith.constant 5 : index
    %c0_81 = arith.constant 0 : index
    %c0_82 = arith.constant 0 : index
    %127 = vector.load %arg6[%c5, %c0_81, %c0_82] : memref<14x1x128xf32, #tpu.memory_space<vmem>>, vector<1x1x128xf32>
    %128 = vector.shape_cast %127 : vector<1x1x128xf32> to vector<1x128xf32>
    %129 = vector.broadcast %128 : vector<1x128xf32> to vector<64x128xf32>
    %130 = arith.addf %126, %129 : vector<64x128xf32>
    %cst_83 = arith.constant 0.000000e+00 : f32
    %131 = vector.broadcast %cst_83 : f32 to vector<64x128xf32>
    %132 = arith.maximumf %130, %131 : vector<64x128xf32>
    %c5_84 = arith.constant 5 : index
    %c0_85 = arith.constant 0 : index
    %c0_86 = arith.constant 0 : index
    %133 = vector.load %arg5[%c5_84, %c0_85, %c0_86] : memref<13x128x128xbf16, #tpu.memory_space<vmem>>, vector<1x128x128xbf16>
    %134 = vector.shape_cast %133 : vector<1x128x128xbf16> to vector<128x128xbf16>
    %135 = arith.truncf %132 : vector<64x128xf32> to vector<64x128xbf16>
    %cst_87 = arith.constant dense<0.000000e+00> : vector<64x128xf32>
    %136 = tpu.matmul %135, %134, %cst_87 {dimension_numbers = #tpu.dot_dimension_numbers<[1], [0], [0], [1], [0, 0, 1, 1], [], []>} : vector<64x128xbf16>, vector<128x128xbf16>, vector<64x128xf32> -> vector<64x128xf32>
    %c6_88 = arith.constant 6 : index
    %c0_89 = arith.constant 0 : index
    %c0_90 = arith.constant 0 : index
    %137 = vector.load %arg6[%c6_88, %c0_89, %c0_90] : memref<14x1x128xf32, #tpu.memory_space<vmem>>, vector<1x1x128xf32>
    %138 = vector.shape_cast %137 : vector<1x1x128xf32> to vector<1x128xf32>
    %139 = vector.broadcast %138 : vector<1x128xf32> to vector<64x128xf32>
    %140 = arith.addf %136, %139 : vector<64x128xf32>
    %cst_91 = arith.constant 0.000000e+00 : f32
    %141 = vector.broadcast %cst_91 : f32 to vector<64x128xf32>
    %142 = arith.cmpf ogt, %140, %141 : vector<64x128xf32>
    %cst_92 = arith.constant 1.000000e-01 : f32
    %143 = vector.broadcast %cst_92 : f32 to vector<64x128xf32>
    %144 = arith.mulf %143, %140 : vector<64x128xf32>
    %145 = arith.select %142, %140, %144 : vector<64x128xi1>, vector<64x128xf32>
    %146 = arith.truncf %2 : vector<8x64xf32> to vector<8x64xbf16>
    %147 = arith.truncf %145 : vector<64x128xf32> to vector<64x128xbf16>
    %cst_93 = arith.constant dense<0.000000e+00> : vector<8x128xf32>
    %148 = tpu.matmul %146, %147, %cst_93 {dimension_numbers = #tpu.dot_dimension_numbers<[1], [0], [0], [1], [0, 0, 1, 1], [], []>} : vector<8x64xbf16>, vector<64x128xbf16>, vector<8x128xf32> -> vector<8x128xf32>
    %c10_94 = arith.constant 10 : index
    %c0_95 = arith.constant 0 : index
    %c0_96 = arith.constant 0 : index
    %149 = vector.load %arg5[%c10_94, %c0_95, %c0_96] : memref<13x128x128xbf16, #tpu.memory_space<vmem>>, vector<1x128x128xbf16>
    %150 = vector.shape_cast %149 : vector<1x128x128xbf16> to vector<128x128xbf16>
    %151 = arith.truncf %148 : vector<8x128xf32> to vector<8x128xbf16>
    %cst_97 = arith.constant dense<0.000000e+00> : vector<8x128xf32>
    %152 = tpu.matmul %151, %150, %cst_97 {dimension_numbers = #tpu.dot_dimension_numbers<[1], [0], [0], [1], [0, 0, 1, 1], [], []>} : vector<8x128xbf16>, vector<128x128xbf16>, vector<8x128xf32> -> vector<8x128xf32>
    %c11 = arith.constant 11 : index
    %c0_98 = arith.constant 0 : index
    %c0_99 = arith.constant 0 : index
    %153 = vector.load %arg6[%c11, %c0_98, %c0_99] : memref<14x1x128xf32, #tpu.memory_space<vmem>>, vector<1x1x128xf32>
    %154 = vector.shape_cast %153 : vector<1x1x128xf32> to vector<1x128xf32>
    %155 = vector.broadcast %154 : vector<1x128xf32> to vector<8x128xf32>
    %156 = arith.addf %152, %155 : vector<8x128xf32>
    %cst_100 = arith.constant 0.000000e+00 : f32
    %157 = vector.broadcast %cst_100 : f32 to vector<8x128xf32>
    %158 = arith.maximumf %156, %157 : vector<8x128xf32>
    %c11_101 = arith.constant 11 : index
    %c0_102 = arith.constant 0 : index
    %c0_103 = arith.constant 0 : index
    %159 = vector.load %arg5[%c11_101, %c0_102, %c0_103] : memref<13x128x128xbf16, #tpu.memory_space<vmem>>, vector<1x128x128xbf16>
    %160 = vector.shape_cast %159 : vector<1x128x128xbf16> to vector<128x128xbf16>
    %161 = arith.truncf %158 : vector<8x128xf32> to vector<8x128xbf16>
    %cst_104 = arith.constant dense<0.000000e+00> : vector<8x128xf32>
    %162 = tpu.matmul %161, %160, %cst_104 {dimension_numbers = #tpu.dot_dimension_numbers<[1], [0], [0], [1], [0, 0, 1, 1], [], []>} : vector<8x128xbf16>, vector<128x128xbf16>, vector<8x128xf32> -> vector<8x128xf32>
    %c12 = arith.constant 12 : index
    %c0_105 = arith.constant 0 : index
    %c0_106 = arith.constant 0 : index
    %163 = vector.load %arg6[%c12, %c0_105, %c0_106] : memref<14x1x128xf32, #tpu.memory_space<vmem>>, vector<1x1x128xf32>
    %164 = vector.shape_cast %163 : vector<1x1x128xf32> to vector<1x128xf32>
    %165 = vector.broadcast %164 : vector<1x128xf32> to vector<8x128xf32>
    %166 = arith.addf %162, %165 : vector<8x128xf32>
    %cst_107 = arith.constant 0.000000e+00 : f32
    %167 = vector.broadcast %cst_107 : f32 to vector<8x128xf32>
    %168 = arith.maximumf %166, %167 : vector<8x128xf32>
    %c12_108 = arith.constant 12 : index
    %c0_109 = arith.constant 0 : index
    %c0_110 = arith.constant 0 : index
    %169 = vector.load %arg5[%c12_108, %c0_109, %c0_110] : memref<13x128x128xbf16, #tpu.memory_space<vmem>>, vector<1x128x128xbf16>
    %170 = vector.shape_cast %169 : vector<1x128x128xbf16> to vector<128x128xbf16>
    %171 = arith.truncf %168 : vector<8x128xf32> to vector<8x128xbf16>
    %cst_111 = arith.constant dense<0.000000e+00> : vector<8x128xf32>
    %172 = tpu.matmul %171, %170, %cst_111 {dimension_numbers = #tpu.dot_dimension_numbers<[1], [0], [0], [1], [0, 0, 1, 1], [], []>} : vector<8x128xbf16>, vector<128x128xbf16>, vector<8x128xf32> -> vector<8x128xf32>
    %c13 = arith.constant 13 : index
    %c0_112 = arith.constant 0 : index
    %c0_113 = arith.constant 0 : index
    %173 = vector.load %arg6[%c13, %c0_112, %c0_113] : memref<14x1x128xf32, #tpu.memory_space<vmem>>, vector<1x1x128xf32>
    %174 = vector.shape_cast %173 : vector<1x1x128xf32> to vector<1x128xf32>
    %175 = vector.broadcast %174 : vector<1x128xf32> to vector<8x128xf32>
    %176 = arith.addf %172, %175 : vector<8x128xf32>
    %c0_114 = arith.constant 0 : index
    %c0_115 = arith.constant 0 : index
    %177 = vector.load %arg7[%c0_114, %c0_115] : memref<8x128xf32, #tpu.memory_space<vmem>>, vector<8x128xf32>
    tpu.vector_store %arg7[%c0_114, %c0_115], %176 {strides = array<i32>} : memref<8x128xf32, #tpu.memory_space<vmem>>, vector<8x128xf32>,
    return
  }
}

</mosaic_0001>

<llo_original>
// kernel: tpu_custom_call.1
$region0: #{tpu_custom_call.1}
  #allocation0 [shape = 'u32[]', space=smem, size = 0x4, offset = 0x4, fixed_abs, tag = 'smem constant byte address 0x4 - core index']
  #allocation1 [shape = 'u32[144,128]{1,0:T(1,128)}', space=vmem, size = 0x12000, scoped, tag = 'internal scratch']
  %s0 = inlined_call_operand.vmem [shape: f32[64,32], index: 0, kind: input, shape index: {}]
  %s1 = inlined_call_operand.vmem [shape: f32[64,64], index: 1, kind: input, shape index: {}]
  %s2 = inlined_call_operand.vmem [shape: f32[64,8], index: 2, kind: input, shape index: {}]
  %s3 = inlined_call_operand.vmem [shape: f32[8,64], index: 3, kind: input, shape index: {}]
  %s4 = inlined_call_operand.vmem [shape: bf16[32,128], index: 4, kind: input, shape index: {}]
  %s5 = inlined_call_operand.hbm [shape: bf16[13,128,128], index: 5, kind: input, shape index: {}]
  %s6 = inlined_call_operand.vmem [shape: f32[14,1,128], index: 6, kind: input, shape index: {}]
  %s7 = inlined_call_operand.hbm [shape: f32[8,128], index: 7, kind: output, shape index: {}]
  %s8 = sld [smem:[#allocation0]]
  $region42: #{tpu_custom_call.1} parent=0
    _
  %s10 = ssub.s32 1, %s8
  %s11 = scalar_select 0, %s10, %s8
  $region1: #{tpu_custom_call.1} parent=0
    #allocation2 [shape = 'u8[425984]{0}', space=vmem, size = 0x68000, scoped, tag = 'input window, operand 5, single buffered']
    #allocation3 [shape = 's32[1]{0}', space=sflag, size = 0x4, scoped, tag = 'scoped memory for tpu_custom_call.1']
    #allocation4 [shape = 's32[1]{0}', space=sflag, size = 0x4, scoped, tag = 'scoped memory for tpu_custom_call.1']
    #allocation5 [shape = 'u8[4096]{0}', space=vmem, size = 0x1000, scoped, tag = 'output window, operand 0, single buffered']
    %12 = vsyncpa [#allocation3], 0
    %13 = vsyncpa [#allocation4], 0
    // Predicated region
    $region2: #{tpu_custom_call.1} parent=1 // pred_check
      _
    $region3: #{tpu_custom_call.1} parent=1 // pred_check_branch
      %15 = sbr.rel (0) target = $region5
    $region4: #{tpu_custom_call.1} parent=1 // pred_region
      _
    $region5: #{tpu_custom_call.1} parent=1 // pred_fallthru
      _
    // Predicated region
    $region6: #{tpu_custom_call.1} parent=1 // pred_check
      _
    $region7: #{tpu_custom_call.1} parent=1 // pred_check_branch
      %17 = sbr.rel (0) target = $region9
    $region8: #{tpu_custom_call.1} parent=1 // pred_region
      _
    $region9: #{tpu_custom_call.1} parent=1 // pred_fallthru
      _
    // Predicated region
    $region10: #{tpu_custom_call.1} parent=1 // pred_check
      _
    $region11: #{tpu_custom_call.1} parent=1 // pred_check_branch
      %19 = sbr.rel (0) target = $region13
    $region12: #{tpu_custom_call.1} parent=1 // pred_region
      _
    $region13: #{tpu_custom_call.1} parent=1 // pred_fallthru
      _
    // Predicated region
    $region14: #{tpu_custom_call.1} parent=1 // pred_check
      _
    $region15: #{tpu_custom_call.1} parent=1 // pred_check_branch
      %21 = sbr.rel (0) target = $region17
    $region16: #{tpu_custom_call.1} parent=1 // pred_region
      _
    $region17: #{tpu_custom_call.1} parent=1 // pred_fallthru
      _
    // Predicated region
    $region18: #{tpu_custom_call.1} parent=1 // pred_check
      _
    $region19: #{tpu_custom_call.1} parent=1 // pred_check_branch
      %23 = sbr.rel (0) target = $region21
    $region20: #{tpu_custom_call.1} parent=1 // pred_region
      _
    $region21: #{tpu_custom_call.1} parent=1 // pred_fallthru
      _
    // Predicated region
    $region22: #{tpu_custom_call.1} parent=1 // pred_check
      _
    $region23: #{tpu_custom_call.1} parent=1 // pred_check_branch
      %25 = sbr.rel (0) target = $region25
    $region24: #{tpu_custom_call.1} parent=1 // pred_region
      %s27 = ssub.s32 13312, 13312
      %28 = vsyncadd [#allocation3], %s27
      %s29 = sshll.u32 [#allocation2], 4
      %s30 = int_to_ptr.vmem [resolvable:$true] %s29
      %35 = dma.hbm_to_vmem [thread:$0]  %s5, 13312, %s30, [#allocation3], 64, 64, 4
    $region25: #{tpu_custom_call.1} parent=1 // pred_fallthru
      _
    // Predicated region
    $region26: #{tpu_custom_call.1} parent=1 // pred_check
      _
    $region27: #{tpu_custom_call.1} parent=1 // pred_check_branch
      %37 = sbr.rel (0) target = $region29
    $region28: #{tpu_custom_call.1} parent=1 // pred_region
      _
    $region29: #{tpu_custom_call.1} parent=1 // pred_fallthru
      _
    // Predicated region
    $region30: #{tpu_custom_call.1} parent=1 // pred_check
      _
    $region31: #{tpu_custom_call.1} parent=1 // pred_check_branch
      %39 = sbr.rel (0) target = $region33
    $region32: #{tpu_custom_call.1} parent=1 // pred_region
      %40 = dma.done [#allocation3], 13312
    $region33: #{tpu_custom_call.1} parent=1 // pred_fallthru
      _
    %v42 = vld [vmem:[%s1] sm:$0xff]
    %v43 = vld [vmem:[%s1 + $0x8] sm:$0xff]
    %v44 = vld [vmem:[%s1 + $0x10] sm:$0xff]
    %v45 = vld [vmem:[%s1 + $0x18] sm:$0xff]
    %v46 = vld [vmem:[%s1 + $0x20] sm:$0xff]
    %v47 = vld [vmem:[%s1 + $0x28] sm:$0xff]
    %v48 = vld [vmem:[%s1 + $0x30] sm:$0xff]
    %v49 = vld [vmem:[%s1 + $0x38] sm:$0xff]
    %v50 = vld [vmem:[%s2] sm:$0xff]
    %v51 = vld [vmem:[%s2 + $0x8] sm:$0xff]
    %v52 = vld [vmem:[%s2 + $0x10] sm:$0xff]
    %v53 = vld [vmem:[%s2 + $0x18] sm:$0xff]
    %v54 = vld [vmem:[%s2 + $0x20] sm:$0xff]
    %v55 = vld [vmem:[%s2 + $0x28] sm:$0xff]
    %v56 = vld [vmem:[%s2 + $0x30] sm:$0xff]
    %v57 = vld [vmem:[%s2 + $0x38] sm:$0xff]
    %v58 = vld [vmem:[%s3] sm:$0xff]
    %v59 = vld [vmem:[%s0] sm:$0xff]
    %v60 = vld [vmem:[%s0 + $0x8] sm:$0xff]
    %v61 = vld [vmem:[%s0 + $0x10] sm:$0xff]
    %v62 = vld [vmem:[%s0 + $0x18] sm:$0xff]
    %v63 = vld [vmem:[%s0 + $0x20] sm:$0xff]
    %v64 = vld [vmem:[%s0 + $0x28] sm:$0xff]
    %v65 = vld [vmem:[%s0 + $0x30] sm:$0xff]
    %v66 = vld [vmem:[%s0 + $0x38] sm:$0xff]
    %v67 = vld [vmem:[%s4] sm:$0xf]
    %v68 = vld [vmem:[%s4 + $0x4] sm:$0xf]
    %v69 = vld [vmem:[%s4 + $0x8] sm:$0xf]
    %v70 = vld [vmem:[%s4 + $0xc] sm:$0xf]
    %v71 = vpack.c.bf16 %v60, %v59
    %v72 = vpack.c.bf16 %v62, %v61
    %v73 = vpack.c.bf16 %v64, %v63
    %v74 = vpack.c.bf16 %v66, %v65
    %v75 = vld [vmem:[%s6] sm:$0x1]
    %v77 = vlaneseq
    %v78 = vshrl.u32 %v77, 7
    %v79 = vsub.s32 0, %v78
    %v80 = vrot.slane %v75, %v79
    %v86 = vunpack.c.l.b16 %v67
    %v87 = vunpack.c.l.b16 %v68
    %v88 = vunpack.c.l.b16 %v69
    %v89 = vunpack.c.l.b16 %v70
    %v90 = vpack.c.b16 %v87, %v86
    %v91 = vpack.c.b16 %v89, %v88
    %vm94 = vcmask 261120
    %v96 = vsel %vm94, %v71, 0
    %v99 = vsel %vm94, %v72, 0
    %v102 = vsel %vm94, %v73, 0
    %v105 = vsel %vm94, %v74, 0
    %107 = vmatprep.subr.bf16.mxu0 0
    %108 = vmatpush1.bf16.msra.mxu0 0
    %109 = vmatprep.subr.bf16.mxu0 0
    %110 = vmatpush1.bf16.msra.mxu0 0
    %111 = vmatprep.subr.bf16.mxu0 0
    %112 = vmatpush1.bf16.msra.mxu0 0
    %113 = vmatprep.subr.bf16.mxu0 0
    %114 = vmatpush1.bf16.msra.mxu0 0
    %115 = vmatprep.subr.bf16.mxu0 0
    %116 = vmatpush1.bf16.msra.mxu0 0
    %117 = vmatprep.subr.bf16.mxu0 0
    %118 = vmatpush1.bf16.msra.mxu0 0
    %119 = vmatprep.subr.bf16.mxu0 0
    %120 = vmatpush1.bf16.msra.mxu0 %v91
    %121 = vmatprep.subr.bf16.mxu0 0
    %122 = vmatpush1.bf16.msra.mxu0 %v90
    %123 = vmatprep.subr.bf16.mxu0 0
    %124 = vmatpush2.bf16.msra.mxu0 0
    %125 = vmatprep.subr.bf16.mxu0 0
    %126 = vmatpush2.bf16.msra.mxu0 0
    %127 = vmatprep.subr.bf16.mxu0 0
    %128 = vmatpush2.bf16.msra.mxu0 0
    %129 = vmatprep.subr.bf16.mxu0 0
    %130 = vmatpush2.bf16.msra.mxu0 0
    %131 = vmatprep.subr.bf16.mxu0 0
    %132 = vmatpush2.bf16.msra.mxu0 0
    %133 = vmatprep.subr.bf16.mxu0 0
    %134 = vmatpush2.bf16.msra.mxu0 0
    %135 = vmatprep.subr.bf16.mxu0 0
    %136 = vmatpush2.bf16.msra.mxu0 0
    %137 = vmatprep.subr.bf16.mxu0 0
    %138 = vmatpush2.bf16.msra.mxu0 0
    %139 = vmatprep.mubr.bf16.mxu0 0
    %140 = vmatmul.mubr.bf16.gmra.mxu0 %v96
    %v141 = vpop.f32.mrf.mxu0
    %v142 = vadd.f32 %v80, %v141
    %v143 = vpop.f32.mrf.mxu0
    %v144 = vpop.f32.mrf.mxu0
    %v145 = vadd.f32 %v80, %v144
    %v146 = vpop.f32.mrf.mxu0
    %147 = vmatprep.mubr.bf16.mxu0 0
    %148 = vmatmul.mubr.bf16.gmra.mxu0 %v99
    %v149 = vpop.f32.mrf.mxu0
    %v150 = vadd.f32 %v80, %v149
    %v151 = vpop.f32.mrf.mxu0
    %v152 = vpop.f32.mrf.mxu0
    %v153 = vadd.f32 %v80, %v152
    %v154 = vpop.f32.mrf.mxu0
    %155 = vmatprep.mubr.bf16.mxu0 0
    %156 = vmatmul.mubr.bf16.gmra.mxu0 %v102
    %v157 = vpop.f32.mrf.mxu0
    %v158 = vadd.f32 %v80, %v157
    %v159 = vpop.f32.mrf.mxu0
    %v160 = vpop.f32.mrf.mxu0
    %v161 = vadd.f32 %v80, %v160
    %v162 = vpop.f32.mrf.mxu0
    %163 = vmatprep.mubr.bf16.mxu0 0
    %164 = vmatmul.mubr.bf16.gmra.mxu0 %v105
    %v165 = vpop.f32.mrf.mxu0
    %v166 = vadd.f32 %v80, %v165
    %v167 = vpop.f32.mrf.mxu0
    %v168 = vpop.f32.mrf.mxu0
    %v169 = vadd.f32 %v80, %v168
    %v170 = vpop.f32.mrf.mxu0
    %171 = vdwg.mxu0
    %v172 = vpack.c.bf16 %v43, %v42
    %v173 = vpack.c.bf16 %v45, %v44
    %v174 = vpack.c.bf16 %v47, %v46
    %v175 = vpack.c.bf16 %v49, %v48
    %v176 = vpack.c.bf16 %v145, %v142
    %v177 = vpack.c.bf16 %v153, %v150
    %v178 = vpack.c.bf16 %v161, %v158
    %v179 = vpack.c.bf16 %v169, %v166
    %vm180 = vcmask 523264
    %v182 = vsel %vm180, %v172, 0
    %v185 = vsel %vm180, %v173, 0
    %v188 = vsel %vm180, %v174, 0
    %v191 = vsel %vm180, %v175, 0
    %193 = vmatprep.subr.bf16.mxu0 0
    %194 = vmatpush1.bf16.msra.mxu0 0
    %195 = vmatprep.subr.bf16.mxu0 0
    %196 = vmatpush1.bf16.msra.mxu0 0
    %197 = vmatprep.subr.bf16.mxu0 0
    %198 = vmatpush1.bf16.msra.mxu0 0
    %199 = vmatprep.subr.bf16.mxu0 0
    %200 = vmatpush1.bf16.msra.mxu0 0
    %201 = vmatprep.subr.bf16.mxu0 0
    %202 = vmatpush1.bf16.msra.mxu0 %v179
    %203 = vmatprep.subr.bf16.mxu0 0
    %204 = vmatpush1.bf16.msra.mxu0 %v178
    %205 = vmatprep.subr.bf16.mxu0 0
    %206 = vmatpush1.bf16.msra.mxu0 %v177
    %207 = vmatprep.subr.bf16.mxu0 0
    %208 = vmatpush1.bf16.msra.mxu0 %v176
    %209 = vmatprep.subr.bf16.mxu0 0
    %210 = vmatpush2.bf16.msra.mxu0 0
    %211 = vmatprep.subr.bf16.mxu0 0
    %212 = vmatpush2.bf16.msra.mxu0 0
    %213 = vmatprep.subr.bf16.mxu0 0
    %214 = vmatpush2.bf16.msra.mxu0 0
    %215 = vmatprep.subr.bf16.mxu0 0
    %216 = vmatpush2.bf16.msra.mxu0 0
    %217 = vmatprep.subr.bf16.mxu0 0
    %218 = vmatpush2.bf16.msra.mxu0 0
    %219 = vmatprep.subr.bf16.mxu0 0
    %220 = vmatpush2.bf16.msra.mxu0 0
    %221 = vmatprep.subr.bf16.mxu0 0
    %222 = vmatpush2.bf16.msra.mxu0 0
    %223 = vmatprep.subr.bf16.mxu0 0
    %224 = vmatpush2.bf16.msra.mxu0 0
    %225 = vmatprep.mubr.bf16.mxu0 0
    %226 = vmatmul.mubr.bf16.gmra.mxu0 %v182
    %v227 = vpop.f32.mrf.mxu0
    %v228 = vadd.f32 0.0, %v227
    %v229 = vpop.f32.mrf.mxu0
    %v230 = vpop.f32.mrf.mxu0
    %v231 = vadd.f32 0.0, %v230
    %v232 = vpop.f32.mrf.mxu0
    %233 = vmatprep.mubr.bf16.mxu0 0
    %234 = vmatmul.mubr.bf16.gmra.mxu0 %v185
    %v235 = vpop.f32.mrf.mxu0
    %v236 = vadd.f32 0.0, %v235
    %v237 = vpop.f32.mrf.mxu0
    %v238 = vpop.f32.mrf.mxu0
    %v239 = vadd.f32 0.0, %v238
    %v240 = vpop.f32.mrf.mxu0
    %241 = vmatprep.mubr.bf16.mxu0 0
    %242 = vmatmul.mubr.bf16.gmra.mxu0 %v188
    %v243 = vpop.f32.mrf.mxu0
    %v244 = vadd.f32 0.0, %v243
    %v245 = vpop.f32.mrf.mxu0
    %v246 = vpop.f32.mrf.mxu0
    %v247 = vadd.f32 0.0, %v246
    %v248 = vpop.f32.mrf.mxu0
    %249 = vmatprep.mubr.bf16.mxu0 0
    %250 = vmatmul.mubr.bf16.gmra.mxu0 %v191
    %v251 = vpop.f32.mrf.mxu0
    %v252 = vadd.f32 0.0, %v251
    %v253 = vpop.f32.mrf.mxu0
    %v254 = vpop.f32.mrf.mxu0
    %v255 = vadd.f32 0.0, %v254
    %v256 = vpop.f32.mrf.mxu0
    %257 = vdwg.mxu0
    %v258 = vld [vmem:[#allocation2] sm:$0xf]
    %v259 = vld [vmem:[#allocation2 + $0x4] sm:$0xf]
    %v260 = vld [vmem:[#allocation2 + $0x8] sm:$0xf]
    %v261 = vld [vmem:[#allocation2 + $0xc] sm:$0xf]
    %v262 = vld [vmem:[#allocation2 + $0x10] sm:$0xf]
    %v263 = vld [vmem:[#allocation2 + $0x14] sm:$0xf]
    %v264 = vld [vmem:[#allocation2 + $0x18] sm:$0xf]
    %v265 = vld [vmem:[#allocation2 + $0x1c] sm:$0xf]
    %v266 = vld [vmem:[#allocation2 + $0x20] sm:$0xf]
    %v267 = vld [vmem:[#allocation2 + $0x24] sm:$0xf]
    %v268 = vld [vmem:[#allocation2 + $0x28] sm:$0xf]
    %v269 = vld [vmem:[#allocation2 + $0x2c] sm:$0xf]
    %v270 = vld [vmem:[#allocation2 + $0x30] sm:$0xf]
    %v271 = vld [vmem:[#allocation2 + $0x34] sm:$0xf]
    %v272 = vld [vmem:[#allocation2 + $0x38] sm:$0xf]
    %v273 = vld [vmem:[#allocation2 + $0x3c] sm:$0xf]
    %v274 = vpack.c.bf16 %v231, %v228
    %v275 = vpack.c.bf16 %v239, %v236
    %v276 = vpack.c.bf16 %v247, %v244
    %v277 = vpack.c.bf16 %v255, %v252
    %s278 = scalar_lea.vmem %s6, 1
    %v279 = vld [vmem:[%s278] sm:$0x1]
    %v281 = vlaneseq
    %v282 = vshrl.u32 %v281, 7
    %v283 = vsub.s32 0, %v282
    %v284 = vrot.slane %v279, %v283
    %v302 = vunpack.c.l.b16 %v258
    %v303 = vunpack.c.l.b16 %v259
    %v304 = vunpack.c.l.b16 %v260
    %v305 = vunpack.c.l.b16 %v261
    %v306 = vunpack.c.l.b16 %v262
    %v307 = vunpack.c.l.b16 %v263
    %v308 = vunpack.c.l.b16 %v264
    %v309 = vunpack.c.l.b16 %v265
    %v310 = vunpack.c.l.b16 %v266
    %v311 = vunpack.c.l.b16 %v267
    %v312 = vunpack.c.l.b16 %v268
    %v313 = vunpack.c.l.b16 %v269
    %v314 = vunpack.c.l.b16 %v270
    %v315 = vunpack.c.l.b16 %v271
    %v316 = vunpack.c.l.b16 %v272
    %v317 = vunpack.c.l.b16 %v273
    %v318 = vpack.c.b16 %v303, %v302
    %v319 = vpack.c.b16 %v305, %v304
    %v320 = vpack.c.b16 %v307, %v306
    %v321 = vpack.c.b16 %v309, %v308
    %v322 = vpack.c.b16 %v311, %v310
    %v323 = vpack.c.b16 %v313, %v312
    %v324 = vpack.c.b16 %v315, %v314
    %v325 = vpack.c.b16 %v317, %v316
    %334 = vmatprep.subr.bf16.mxu0 0
    %335 = vmatpush1.bf16.msra.mxu0 %v325
    %336 = vmatprep.subr.bf16.mxu0 0
    %337 = vmatpush1.bf16.msra.mxu0 %v324
    %338 = vmatprep.subr.bf16.mxu0 0
    %339 = vmatpush1.bf16.msra.mxu0 %v323
    %340 = vmatprep.subr.bf16.mxu0 0
    %341 = vmatpush1.bf16.msra.mxu0 %v322
    %342 = vmatprep.subr.bf16.mxu0 0
    %343 = vmatpush1.bf16.msra.mxu0 %v321
    %344 = vmatprep.subr.bf16.mxu0 0
    %345 = vmatpush1.bf16.msra.mxu0 %v320
    %346 = vmatprep.subr.bf16.mxu0 0
    %347 = vmatpush1.bf16.msra.mxu0 %v319
    %348 = vmatprep.subr.bf16.mxu0 0
    %349 = vmatpush1.bf16.msra.mxu0 %v318
    %350 = vmatprep.subr.bf16.mxu0 0
    %351 = vmatpush2.bf16.msra.mxu0 0
    %352 = vmatprep.subr.bf16.mxu0 0
    %353 = vmatpush2.bf16.msra.mxu0 0
    %354 = vmatprep.subr.bf16.mxu0 0
    %355 = vmatpush2.bf16.msra.mxu0 0
    %356 = vmatprep.subr.bf16.mxu0 0
    %357 = vmatpush2.bf16.msra.mxu0 0
    %358 = vmatprep.subr.bf16.mxu0 0
    %359 = vmatpush2.bf16.msra.mxu0 0
    %360 = vmatprep.subr.bf16.mxu0 0
    %361 = vmatpush2.bf16.msra.mxu0 0
    %362 = vmatprep.subr.bf16.mxu0 0
    %363 = vmatpush2.bf16.msra.mxu0 0
    %364 = vmatprep.subr.bf16.mxu0 0
    %365 = vmatpush2.bf16.msra.mxu0 0
    %366 = vmatprep.mubr.bf16.mxu0 0
    %367 = vmatmul.mubr.bf16.gmra.mxu0 %v274
    %v368 = vpop.f32.mrf.mxu0
    %v369 = vadd.f32 %v284, %v368
    %v370 = vpop.f32.mrf.mxu0
    %v371 = vpop.f32.mrf.mxu0
    %v372 = vadd.f32 %v284, %v371
    %v373 = vpop.f32.mrf.mxu0
    %374 = vmatprep.mubr.bf16.mxu0 0
    %375 = vmatmul.mubr.bf16.gmra.mxu0 %v275
    %v376 = vpop.f32.mrf.mxu0
    %v377 = vadd.f32 %v284, %v376
    %v378 = vpop.f32.mrf.mxu0
    %v379 = vpop.f32.mrf.mxu0
    %v380 = vadd.f32 %v284, %v379
    %v381 = vpop.f32.mrf.mxu0
    %382 = vmatprep.mubr.bf16.mxu0 0
    %383 = vmatmul.mubr.bf16.gmra.mxu0 %v276
    %v384 = vpop.f32.mrf.mxu0
    %v385 = vadd.f32 %v284, %v384
    %v386 = vpop.f32.mrf.mxu0
    %v387 = vpop.f32.mrf.mxu0
    %v388 = vadd.f32 %v284, %v387
    %v389 = vpop.f32.mrf.mxu0
    %390 = vmatprep.mubr.bf16.mxu0 0
    %391 = vmatmul.mubr.bf16.gmra.mxu0 %v277
    %v392 = vpop.f32.mrf.mxu0
    %v393 = vadd.f32 %v284, %v392
    %v394 = vpop.f32.mrf.mxu0
    %v395 = vpop.f32.mrf.mxu0
    %v396 = vadd.f32 %v284, %v395
    %v397 = vpop.f32.mrf.mxu0
    %398 = vdwg.mxu0
    %v399 = vmax.f32 %v369, 0.0
    %v400 = vmax.f32 %v372, 0.0
    %v401 = vmax.f32 %v377, 0.0
    %v402 = vmax.f32 %v380, 0.0
    %v403 = vmax.f32 %v385, 0.0
    %v404 = vmax.f32 %v388, 0.0
    %v405 = vmax.f32 %v393, 0.0
    %v406 = vmax.f32 %v396, 0.0
    %s407 = scalar_lea.vmem [#allocation2], 64
    %v408 = vld [vmem:[%s407] sm:$0xf]
    %v409 = vld [vmem:[%s407 + $0x4] sm:$0xf]
    %v410 = vld [vmem:[%s407 + $0x8] sm:$0xf]
    %v411 = vld [vmem:[%s407 + $0xc] sm:$0xf]
    %v412 = vld [vmem:[%s407 + $0x10] sm:$0xf]
    %v413 = vld [vmem:[%s407 + $0x14] sm:$0xf]
    %v414 = vld [vmem:[%s407 + $0x18] sm:$0xf]
    %v415 = vld [vmem:[%s407 + $0x1c] sm:$0xf]
    %v416 = vld [vmem:[%s407 + $0x20] sm:$0xf]
    %v417 = vld [vmem:[%s407 + $0x24] sm:$0xf]
    %v418 = vld [vmem:[%s407 + $0x28] sm:$0xf]
    %v419 = vld [vmem:[%s407 + $0x2c] sm:$0xf]
    %v420 = vld [vmem:[%s407 + $0x30] sm:$0xf]
    %v421 = vld [vmem:[%s407 + $0x34] sm:$0xf]
    %v422 = vld [vmem:[%s407 + $0x38] sm:$0xf]
    %v423 = vld [vmem:[%s407 + $0x3c] sm:$0xf]
    %v424 = vpack.c.bf16 %v400, %v399
    %v425 = vpack.c.bf16 %v402, %v401
    %v426 = vpack.c.bf16 %v404, %v403
    %v427 = vpack.c.bf16 %v406, %v405
    %s428 = scalar_lea.vmem %s6, 2
    %v429 = vld [vmem:[%s428] sm:$0x1]
    %v431 = vlaneseq
    %v432 = vshrl.u32 %v431, 7
    %v433 = vsub.s32 0, %v432
    %v434 = vrot.slane %v429, %v433
    %v452 = vunpack.c.l.b16 %v408
    %v453 = vunpack.c.l.b16 %v409
    %v454 = vunpack.c.l.b16 %v410
    %v455 = vunpack.c.l.b16 %v411
    %v456 = vunpack.c.l.b16 %v412
    %v457 = vunpack.c.l.b16 %v413
    %v458 = vunpack.c.l.b16 %v414
    %v459 = vunpack.c.l.b16 %v415
    %v460 = vunpack.c.l.b16 %v416
    %v461 = vunpack.c.l.b16 %v417
    %v462 = vunpack.c.l.b16 %v418
    %v463 = vunpack.c.l.b16 %v419
    %v464 = vunpack.c.l.b16 %v420
    %v465 = vunpack.c.l.b16 %v421
    %v466 = vunpack.c.l.b16 %v422
    %v467 = vunpack.c.l.b16 %v423
    %v468 = vpack.c.b16 %v453, %v452
    %v469 = vpack.c.b16 %v455, %v454
    %v470 = vpack.c.b16 %v457, %v456
    %v471 = vpack.c.b16 %v459, %v458
    %v472 = vpack.c.b16 %v461, %v460
    %v473 = vpack.c.b16 %v463, %v462
    %v474 = vpack.c.b16 %v465, %v464
    %v475 = vpack.c.b16 %v467, %v466
    %484 = vmatprep.subr.bf16.mxu0 0
    %485 = vmatpush1.bf16.msra.mxu0 %v475
    %486 = vmatprep.subr.bf16.mxu0 0
    %487 = vmatpush1.bf16.msra.mxu0 %v474
    %488 = vmatprep.subr.bf16.mxu0 0
    %489 = vmatpush1.bf16.msra.mxu0 %v473
    %490 = vmatprep.subr.bf16.mxu0 0
    %491 = vmatpush1.bf16.msra.mxu0 %v472
    %492 = vmatprep.subr.bf16.mxu0 0
    %493 = vmatpush1.bf16.msra.mxu0 %v471
    %494 = vmatprep.subr.bf16.mxu0 0
    %495 = vmatpush1.bf16.msra.mxu0 %v470
    %496 = vmatprep.subr.bf16.mxu0 0
    %497 = vmatpush1.bf16.msra.mxu0 %v469
    %498 = vmatprep.subr.bf16.mxu0 0
    %499 = vmatpush1.bf16.msra.mxu0 %v468
    %500 = vmatprep.subr.bf16.mxu0 0
    %501 = vmatpush2.bf16.msra.mxu0 0
    %502 = vmatprep.subr.bf16.mxu0 0
    %503 = vmatpush2.bf16.msra.mxu0 0
    %504 = vmatprep.subr.bf16.mxu0 0
    %505 = vmatpush2.bf16.msra.mxu0 0
    %506 = vmatprep.subr.bf16.mxu0 0
    %507 = vmatpush2.bf16.msra.mxu0 0
    %508 = vmatprep.subr.bf16.mxu0 0
    %509 = vmatpush2.bf16.msra.mxu0 0
    %510 = vmatprep.subr.bf16.mxu0 0
    %511 = vmatpush2.bf16.msra.mxu0 0
    %512 = vmatprep.subr.bf16.mxu0 0
    %513 = vmatpush2.bf16.msra.mxu0 0
    %514 = vmatprep.subr.bf16.mxu0 0
    %515 = vmatpush2.bf16.msra.mxu0 0
    %516 = vmatprep.mubr.bf16.mxu0 0
    %517 = vmatmul.mubr.bf16.gmra.mxu0 %v424
    %v518 = vpop.f32.mrf.mxu0
    %v519 = vadd.f32 %v434, %v518
    %v520 = vpop.f32.mrf.mxu0
    %v521 = vpop.f32.mrf.mxu0
    %v522 = vadd.f32 %v434, %v521
    %v523 = vpop.f32.mrf.mxu0
    %524 = vmatprep.mubr.bf16.mxu0 0
    %525 = vmatmul.mubr.bf16.gmra.mxu0 %v425
    %v526 = vpop.f32.mrf.mxu0
    %v527 = vadd.f32 %v434, %v526
    %v528 = vpop.f32.mrf.mxu0
    %v529 = vpop.f32.mrf.mxu0
    %v530 = vadd.f32 %v434, %v529
    %v531 = vpop.f32.mrf.mxu0
    %532 = vmatprep.mubr.bf16.mxu0 0
    %533 = vmatmul.mubr.bf16.gmra.mxu0 %v426
    %v534 = vpop.f32.mrf.mxu0
    %v535 = vadd.f32 %v434, %v534
    %v536 = vpop.f32.mrf.mxu0
    %v537 = vpop.f32.mrf.mxu0
    %v538 = vadd.f32 %v434, %v537
    %v539 = vpop.f32.mrf.mxu0
    %540 = vmatprep.mubr.bf16.mxu0 0
    %541 = vmatmul.mubr.bf16.gmra.mxu0 %v427
    %v542 = vpop.f32.mrf.mxu0
    %v543 = vadd.f32 %v434, %v542
    %v544 = vpop.f32.mrf.mxu0
    %v545 = vpop.f32.mrf.mxu0
    %v546 = vadd.f32 %v434, %v545
    %v547 = vpop.f32.mrf.mxu0
    %548 = vdwg.mxu0
    %vm549 = vcmp.gt.f32.partialorder %v519, 0.0
    %vm550 = vcmp.gt.f32.partialorder %v522, 0.0
    %vm551 = vcmp.gt.f32.partialorder %v527, 0.0
    %vm552 = vcmp.gt.f32.partialorder %v530, 0.0
    %vm553 = vcmp.gt.f32.partialorder %v535, 0.0
    %vm554 = vcmp.gt.f32.partialorder %v538, 0.0
    %vm555 = vcmp.gt.f32.partialorder %v543, 0.0
    %vm556 = vcmp.gt.f32.partialorder %v546, 0.0
    %v557 = vmul.f32 %v519, 0.1
    %v558 = vmul.f32 %v522, 0.1
    %v559 = vmul.f32 %v527, 0.1
    %v560 = vmul.f32 %v530, 0.1
    %v561 = vmul.f32 %v535, 0.1
    %v562 = vmul.f32 %v538, 0.1
    %v563 = vmul.f32 %v543, 0.1
    %v564 = vmul.f32 %v546, 0.1
    %v565 = vsel %vm549, %v519, %v557
    %v566 = vsel %vm550, %v522, %v558
    %v567 = vsel %vm551, %v527, %v559
    %v568 = vsel %vm552, %v530, %v560
    %v569 = vsel %vm553, %v535, %v561
    %v570 = vsel %vm554, %v538, %v562
    %v571 = vsel %vm555, %v543, %v563
    %v572 = vsel %vm556, %v546, %v564
    %v573 = vpack.c.bf16 %v58, %v58
    %v574 = vpack.c.bf16 %v566, %v565
    %v575 = vpack.c.bf16 %v568, %v567
    %v576 = vpack.c.bf16 %v570, %v569
    %v577 = vpack.c.bf16 %v572, %v571
    %v579 = vsel %vm180, %v573, 0
    %581 = vmatprep.subr.bf16.mxu0 0
    %582 = vmatpush1.bf16.msra.mxu0 0
    %583 = vmatprep.subr.bf16.mxu0 0
    %584 = vmatpush1.bf16.msra.mxu0 0
    %585 = vmatprep.subr.bf16.mxu0 0
    %586 = vmatpush1.bf16.msra.mxu0 0
    %587 = vmatprep.subr.bf16.mxu0 0
    %588 = vmatpush1.bf16.msra.mxu0 0
    %589 = vmatprep.subr.bf16.mxu0 0
    %590 = vmatpush1.bf16.msra.mxu0 %v577
    %591 = vmatprep.subr.bf16.mxu0 0
    %592 = vmatpush1.bf16.msra.mxu0 %v576
    %593 = vmatprep.subr.bf16.mxu0 0
    %594 = vmatpush1.bf16.msra.mxu0 %v575
    %595 = vmatprep.subr.bf16.mxu0 0
    %596 = vmatpush1.bf16.msra.mxu0 %v574
    %597 = vmatprep.subr.bf16.mxu0 0
    %598 = vmatpush2.bf16.msra.mxu0 0
    %599 = vmatprep.subr.bf16.mxu0 0
    %600 = vmatpush2.bf16.msra.mxu0 0
    %601 = vmatprep.subr.bf16.mxu0 0
    %602 = vmatpush2.bf16.msra.mxu0 0
    %603 = vmatprep.subr.bf16.mxu0 0
    %604 = vmatpush2.bf16.msra.mxu0 0
    %605 = vmatprep.subr.bf16.mxu0 0
    %606 = vmatpush2.bf16.msra.mxu0 0
    %607 = vmatprep.subr.bf16.mxu0 0
    %608 = vmatpush2.bf16.msra.mxu0 0
    %609 = vmatprep.subr.bf16.mxu0 0
    %610 = vmatpush2.bf16.msra.mxu0 0
    %611 = vmatprep.subr.bf16.mxu0 0
    %612 = vmatpush2.bf16.msra.mxu0 0
    %613 = vmatprep.mubr.bf16.mxu0 0
    %614 = vmatmul.mubr.bf16.gmra.mxu0 %v579
    %v615 = vpop.f32.mrf.mxu0
    %v616 = vadd.f32 0.0, %v615
    %v617 = vpop.f32.mrf.mxu0
    %v618 = vpop.f32.mrf.mxu0
    %v619 = vpop.f32.mrf.mxu0
    %620 = vdwg.mxu0
    %s621 = scalar_lea.vmem [#allocation2], 384
    %v622 = vld [vmem:[%s621] sm:$0xf]
    %v623 = vld [vmem:[%s621 + $0x4] sm:$0xf]
    %v624 = vld [vmem:[%s621 + $0x8] sm:$0xf]
    %v625 = vld [vmem:[%s621 + $0xc] sm:$0xf]
    %v626 = vld [vmem:[%s621 + $0x10] sm:$0xf]
    %v627 = vld [vmem:[%s621 + $0x14] sm:$0xf]
    %v628 = vld [vmem:[%s621 + $0x18] sm:$0xf]
    %v629 = vld [vmem:[%s621 + $0x1c] sm:$0xf]
    %v630 = vld [vmem:[%s621 + $0x20] sm:$0xf]
    %v631 = vld [vmem:[%s621 + $0x24] sm:$0xf]
    %v632 = vld [vmem:[%s621 + $0x28] sm:$0xf]
    %v633 = vld [vmem:[%s621 + $0x2c] sm:$0xf]
    %v634 = vld [vmem:[%s621 + $0x30] sm:$0xf]
    %v635 = vld [vmem:[%s621 + $0x34] sm:$0xf]
    %v636 = vld [vmem:[%s621 + $0x38] sm:$0xf]
    %v637 = vld [vmem:[%s621 + $0x3c] sm:$0xf]
    %v638 = vpack.c.bf16 %v616, %v616
    %s639 = scalar_lea.vmem %s6, 7
    %v640 = vld [vmem:[%s639] sm:$0x1]
    %v642 = vlaneseq
    %v643 = vshrl.u32 %v642, 7
    %v644 = vsub.s32 0, %v643
    %v645 = vrot.slane %v640, %v644
    %v663 = vunpack.c.l.b16 %v622
    %v664 = vunpack.c.l.b16 %v623
    %v665 = vunpack.c.l.b16 %v624
    %v666 = vunpack.c.l.b16 %v625
    %v667 = vunpack.c.l.b16 %v626
    %v668 = vunpack.c.l.b16 %v627
    %v669 = vunpack.c.l.b16 %v628
    %v670 = vunpack.c.l.b16 %v629
    %v671 = vunpack.c.l.b16 %v630
    %v672 = vunpack.c.l.b16 %v631
    %v673 = vunpack.c.l.b16 %v632
    %v674 = vunpack.c.l.b16 %v633
    %v675 = vunpack.c.l.b16 %v634
    %v676 = vunpack.c.l.b16 %v635
    %v677 = vunpack.c.l.b16 %v636
    %v678 = vunpack.c.l.b16 %v637
    %v679 = vpack.c.b16 %v664, %v663
    %v680 = vpack.c.b16 %v666, %v665
    %v681 = vpack.c.b16 %v668, %v667
    %v682 = vpack.c.b16 %v670, %v669
    %v683 = vpack.c.b16 %v672, %v671
    %v684 = vpack.c.b16 %v674, %v673
    %v685 = vpack.c.b16 %v676, %v675
    %v686 = vpack.c.b16 %v678, %v677
    %695 = vmatprep.subr.bf16.mxu0 0
    %696 = vmatpush1.bf16.msra.mxu0 %v686
    %697 = vmatprep.subr.bf16.mxu0 0
    %698 = vmatpush1.bf16.msra.mxu0 %v685
    %699 = vmatprep.subr.bf16.mxu0 0
    %700 = vmatpush1.bf16.msra.mxu0 %v684
    %701 = vmatprep.subr.bf16.mxu0 0
    %702 = vmatpush1.bf16.msra.mxu0 %v683
    %703 = vmatprep.subr.bf16.mxu0 0
    %704 = vmatpush1.bf16.msra.mxu0 %v682
    %705 = vmatprep.subr.bf16.mxu0 0
    %706 = vmatpush1.bf16.msra.mxu0 %v681
    %707 = vmatprep.subr.bf16.mxu0 0
    %708 = vmatpush1.bf16.msra.mxu0 %v680
    %709 = vmatprep.subr.bf16.mxu0 0
    %710 = vmatpush1.bf16.msra.mxu0 %v679
    %711 = vmatprep.subr.bf16.mxu0 0
    %712 = vmatpush2.bf16.msra.mxu0 0
    %713 = vmatprep.subr.bf16.mxu0 0
    %714 = vmatpush2.bf16.msra.mxu0 0
    %715 = vmatprep.subr.bf16.mxu0 0
    %716 = vmatpush2.bf16.msra.mxu0 0
    %717 = vmatprep.subr.bf16.mxu0 0
    %718 = vmatpush2.bf16.msra.mxu0 0
    %719 = vmatprep.subr.bf16.mxu0 0
    %720 = vmatpush2.bf16.msra.mxu0 0
    %721 = vmatprep.subr.bf16.mxu0 0
    %722 = vmatpush2.bf16.msra.mxu0 0
    %723 = vmatprep.subr.bf16.mxu0 0
    %724 = vmatpush2.bf16.msra.mxu0 0
    %725 = vmatprep.subr.bf16.mxu0 0
    %726 = vmatpush2.bf16.msra.mxu0 0
    %727 = vmatprep.mubr.bf16.mxu0 0
    %728 = vmatmul.mubr.bf16.gmra.mxu0 %v638
    %v729 = vpop.f32.mrf.mxu0
    %v730 = vadd.f32 %v645, %v729
    %v731 = vpop.f32.mrf.mxu0
    %v732 = vpop.f32.mrf.mxu0
    %v733 = vpop.f32.mrf.mxu0
    %734 = vdwg.mxu0
    %v735 = vmax.f32 %v730, 0.0
    %s736 = scalar_lea.vmem [#allocation2], 448
    %v737 = vld [vmem:[%s736] sm:$0xf]
    %v738 = vld [vmem:[%s736 + $0x4] sm:$0xf]
    %v739 = vld [vmem:[%s736 + $0x8] sm:$0xf]
    %v740 = vld [vmem:[%s736 + $0xc] sm:$0xf]
    %v741 = vld [vmem:[%s736 + $0x10] sm:$0xf]
    %v742 = vld [vmem:[%s736 + $0x14] sm:$0xf]
    %v743 = vld [vmem:[%s736 + $0x18] sm:$0xf]
    %v744 = vld [vmem:[%s736 + $0x1c] sm:$0xf]
    %v745 = vld [vmem:[%s736 + $0x20] sm:$0xf]
    %v746 = vld [vmem:[%s736 + $0x24] sm:$0xf]
    %v747 = vld [vmem:[%s736 + $0x28] sm:$0xf]
    %v748 = vld [vmem:[%s736 + $0x2c] sm:$0xf]
    %v749 = vld [vmem:[%s736 + $0x30] sm:$0xf]
    %v750 = vld [vmem:[%s736 + $0x34] sm:$0xf]
    %v751 = vld [vmem:[%s736 + $0x38] sm:$0xf]
    %v752 = vld [vmem:[%s736 + $0x3c] sm:$0xf]
    %v753 = vpack.c.bf16 %v735, %v735
    %s754 = scalar_lea.vmem %s6, 8
    %v755 = vld [vmem:[%s754] sm:$0x1]
    %v757 = vlaneseq
    %v758 = vshrl.u32 %v757, 7
    %v759 = vsub.s32 0, %v758
    %v760 = vrot.slane %v755, %v759
    %v778 = vunpack.c.l.b16 %v737
    %v779 = vunpack.c.l.b16 %v738
    %v780 = vunpack.c.l.b16 %v739
    %v781 = vunpack.c.l.b16 %v740
    %v782 = vunpack.c.l.b16 %v741
    %v783 = vunpack.c.l.b16 %v742
    %v784 = vunpack.c.l.b16 %v743
    %v785 = vunpack.c.l.b16 %v744
    %v786 = vunpack.c.l.b16 %v745
    %v787 = vunpack.c.l.b16 %v746
    %v788 = vunpack.c.l.b16 %v747
    %v789 = vunpack.c.l.b16 %v748
    %v790 = vunpack.c.l.b16 %v749
    %v791 = vunpack.c.l.b16 %v750
    %v792 = vunpack.c.l.b16 %v751
    %v793 = vunpack.c.l.b16 %v752
    %v794 = vpack.c.b16 %v779, %v778
    %v795 = vpack.c.b16 %v781, %v780
    %v796 = vpack.c.b16 %v783, %v782
    %v797 = vpack.c.b16 %v785, %v784
    %v798 = vpack.c.b16 %v787, %v786
    %v799 = vpack.c.b16 %v789, %v788
    %v800 = vpack.c.b16 %v791, %v790
    %v801 = vpack.c.b16 %v793, %v792
    %810 = vmatprep.subr.bf16.mxu0 0
    %811 = vmatpush1.bf16.msra.mxu0 %v801
    %812 = vmatprep.subr.bf16.mxu0 0
    %813 = vmatpush1.bf16.msra.mxu0 %v800
    %814 = vmatprep.subr.bf16.mxu0 0
    %815 = vmatpush1.bf16.msra.mxu0 %v799
    %816 = vmatprep.subr.bf16.mxu0 0
    %817 = vmatpush1.bf16.msra.mxu0 %v798
    %818 = vmatprep.subr.bf16.mxu0 0
    %819 = vmatpush1.bf16.msra.mxu0 %v797
    %820 = vmatprep.subr.bf16.mxu0 0
    %821 = vmatpush1.bf16.msra.mxu0 %v796
    %822 = vmatprep.subr.bf16.mxu0 0
    %823 = vmatpush1.bf16.msra.mxu0 %v795
    %824 = vmatprep.subr.bf16.mxu0 0
    %825 = vmatpush1.bf16.msra.mxu0 %v794
    %826 = vmatprep.subr.bf16.mxu0 0
    %827 = vmatpush2.bf16.msra.mxu0 0
    %828 = vmatprep.subr.bf16.mxu0 0
    %829 = vmatpush2.bf16.msra.mxu0 0
    %830 = vmatprep.subr.bf16.mxu0 0
    %831 = vmatpush2.bf16.msra.mxu0 0
    %832 = vmatprep.subr.bf16.mxu0 0
    %833 = vmatpush2.bf16.msra.mxu0 0
    %834 = vmatprep.subr.bf16.mxu0 0
    %835 = vmatpush2.bf16.msra.mxu0 0
    %836 = vmatprep.subr.bf16.mxu0 0
    %837 = vmatpush2.bf16.msra.mxu0 0
    %838 = vmatprep.subr.bf16.mxu0 0
    %839 = vmatpush2.bf16.msra.mxu0 0
    %840 = vmatprep.subr.bf16.mxu0 0
    %841 = vmatpush2.bf16.msra.mxu0 0
    %842 = vmatprep.mubr.bf16.mxu0 0
    %843 = vmatmul.mubr.bf16.gmra.mxu0 %v753
    %v844 = vpop.f32.mrf.mxu0
    %v845 = vadd.f32 %v760, %v844
    %v846 = vpop.f32.mrf.mxu0
    %v847 = vpop.f32.mrf.mxu0
    %v848 = vpop.f32.mrf.mxu0
    %849 = vdwg.mxu0
    %v850 = vmax.f32 %v845, 0.0
    %v851 = vpack.c.bf16 %v51, %v50
    %v852 = vpack.c.bf16 %v53, %v52
    %v853 = vpack.c.bf16 %v55, %v54
    %v854 = vpack.c.bf16 %v57, %v56
    %v855 = vpack.c.bf16 %v850, %v850
    %vm856 = vcmask 64512
    %v858 = vsel %vm856, %v851, 0
    %v861 = vsel %vm856, %v852, 0
    %v864 = vsel %vm856, %v853, 0
    %v867 = vsel %vm856, %v854, 0
    %vm869 = vcmask 1043456
    %v871 = vsel %vm869, %v855, 0
    %873 = vmatprep.subr.bf16.mxu0 0
    %874 = vmatpush1.bf16.msra.mxu0 0
    %875 = vmatprep.subr.bf16.mxu0 0
    %876 = vmatpush1.bf16.msra.mxu0 0
    %877 = vmatprep.subr.bf16.mxu0 0
    %878 = vmatpush1.bf16.msra.mxu0 0
    %879 = vmatprep.subr.bf16.mxu0 0
    %880 = vmatpush1.bf16.msra.mxu0 0
    %881 = vmatprep.subr.bf16.mxu0 0
    %882 = vmatpush1.bf16.msra.mxu0 0
    %883 = vmatprep.subr.bf16.mxu0 0
    %884 = vmatpush1.bf16.msra.mxu0 0
    %885 = vmatprep.subr.bf16.mxu0 0
    %886 = vmatpush1.bf16.msra.mxu0 0
    %887 = vmatprep.subr.bf16.mxu0 0
    %888 = vmatpush1.bf16.msra.mxu0 %v871
    %889 = vmatprep.subr.bf16.mxu0 0
    %890 = vmatpush2.bf16.msra.mxu0 0
    %891 = vmatprep.subr.bf16.mxu0 0
    %892 = vmatpush2.bf16.msra.mxu0 0
    %893 = vmatprep.subr.bf16.mxu0 0
    %894 = vmatpush2.bf16.msra.mxu0 0
    %895 = vmatprep.subr.bf16.mxu0 0
    %896 = vmatpush2.bf16.msra.mxu0 0
    %897 = vmatprep.subr.bf16.mxu0 0
    %898 = vmatpush2.bf16.msra.mxu0 0
    %899 = vmatprep.subr.bf16.mxu0 0
    %900 = vmatpush2.bf16.msra.mxu0 0
    %901 = vmatprep.subr.bf16.mxu0 0
    %902 = vmatpush2.bf16.msra.mxu0 0
    %903 = vmatprep.subr.bf16.mxu0 0
    %904 = vmatpush2.bf16.msra.mxu0 0
    %905 = vmatprep.mubr.bf16.mxu0 0
    %906 = vmatmul.mubr.bf16.gmra.mxu0 %v858
    %v907 = vpop.f32.mrf.mxu0
    %v908 = vadd.f32 0.0, %v907
    %v909 = vpop.f32.mrf.mxu0
    %v910 = vpop.f32.mrf.mxu0
    %v911 = vadd.f32 0.0, %v910
    %v912 = vpop.f32.mrf.mxu0
    %913 = vmatprep.mubr.bf16.mxu0 0
    %914 = vmatmul.mubr.bf16.gmra.mxu0 %v861
    %v915 = vpop.f32.mrf.mxu0
    %v916 = vadd.f32 0.0, %v915
    %v917 = vpop.f32.mrf.mxu0
    %v918 = vpop.f32.mrf.mxu0
    %v919 = vadd.f32 0.0, %v918
    %v920 = vpop.f32.mrf.mxu0
    %921 = vmatprep.mubr.bf16.mxu0 0
    %922 = vmatmul.mubr.bf16.gmra.mxu0 %v864
    %v923 = vpop.f32.mrf.mxu0
    %v924 = vadd.f32 0.0, %v923
    %v925 = vpop.f32.mrf.mxu0
    %v926 = vpop.f32.mrf.mxu0
    %v927 = vadd.f32 0.0, %v926
    %v928 = vpop.f32.mrf.mxu0
    %929 = vmatprep.mubr.bf16.mxu0 0
    %930 = vmatmul.mubr.bf16.gmra.mxu0 %v867
    %v931 = vpop.f32.mrf.mxu0
    %v932 = vadd.f32 0.0, %v931
    %v933 = vpop.f32.mrf.mxu0
    %v934 = vpop.f32.mrf.mxu0
    %v935 = vadd.f32 0.0, %v934
    %v936 = vpop.f32.mrf.mxu0
    %937 = vdwg.mxu0
    %938 = vmatprep.subr.bf16.mxu0 0
    %939 = vmatpush1.bf16.msra.mxu0 0
    %940 = vmatprep.subr.bf16.mxu0 0
    %941 = vmatpush1.bf16.msra.mxu0 0
    %942 = vmatprep.subr.bf16.mxu0 0
    %943 = vmatpush1.bf16.msra.mxu0 0
    %944 = vmatprep.subr.bf16.mxu0 0
    %945 = vmatpush1.bf16.msra.mxu0 0
    %946 = vmatprep.subr.bf16.mxu0 0
    %947 = vmatpush1.bf16.msra.mxu0 %v577
    %948 = vmatprep.subr.bf16.mxu0 0
    %949 = vmatpush1.bf16.msra.mxu0 %v576
    %950 = vmatprep.subr.bf16.mxu0 0
    %951 = vmatpush1.bf16.msra.mxu0 %v575
    %952 = vmatprep.subr.bf16.mxu0 0
    %953 = vmatpush1.bf16.msra.mxu0 %v574
    %954 = vmatprep.subr.bf16.mxu0 0
    %955 = vmatpush2.bf16.msra.mxu0 0
    %956 = vmatprep.subr.bf16.mxu0 0
    %957 = vmatpush2.bf16.msra.mxu0 0
    %958 = vmatprep.subr.bf16.mxu0 0
    %959 = vmatpush2.bf16.msra.mxu0 0
    %960 = vmatprep.subr.bf16.mxu0 0
    %961 = vmatpush2.bf16.msra.mxu0 0
    %962 = vmatprep.subr.bf16.mxu0 0
    %963 = vmatpush2.bf16.msra.mxu0 0
    %964 = vmatprep.subr.bf16.mxu0 0
    %965 = vmatpush2.bf16.msra.mxu0 0
    %966 = vmatprep.subr.bf16.mxu0 0
    %967 = vmatpush2.bf16.msra.mxu0 0
    %968 = vmatprep.subr.bf16.mxu0 0
    %969 = vmatpush2.bf16.msra.mxu0 0
    %970 = vmatprep.mubr.bf16.mxu0 0
    %971 = vmatmul.mubr.bf16.gmra.mxu0 %v182
    %v972 = vpop.f32.mrf.mxu0
    %v973 = vadd.f32 %v908, %v972
    %v974 = vpop.f32.mrf.mxu0
    %v975 = vpop.f32.mrf.mxu0
    %v976 = vadd.f32 %v911, %v975
    %v977 = vpop.f32.mrf.mxu0
    %978 = vmatprep.mubr.bf16.mxu0 0
    %979 = vmatmul.mubr.bf16.gmra.mxu0 %v185
    %v980 = vpop.f32.mrf.mxu0
    %v981 = vadd.f32 %v916, %v980
    %v982 = vpop.f32.mrf.mxu0
    %v983 = vpop.f32.mrf.mxu0
    %v984 = vadd.f32 %v919, %v983
    %v985 = vpop.f32.mrf.mxu0
    %986 = vmatprep.mubr.bf16.mxu0 0
    %987 = vmatmul.mubr.bf16.gmra.mxu0 %v188
    %v988 = vpop.f32.mrf.mxu0
    %v989 = vadd.f32 %v924, %v988
    %v990 = vpop.f32.mrf.mxu0
    %v991 = vpop.f32.mrf.mxu0
    %v992 = vadd.f32 %v927, %v991
    %v993 = vpop.f32.mrf.mxu0
    %994 = vmatprep.mubr.bf16.mxu0 0
    %995 = vmatmul.mubr.bf16.gmra.mxu0 %v191
    %v996 = vpop.f32.mrf.mxu0
    %v997 = vadd.f32 %v932, %v996
    %v998 = vpop.f32.mrf.mxu0
    %v999 = vpop.f32.mrf.mxu0
    %v1000 = vadd.f32 %v935, %v999
    %v1001 = vpop.f32.mrf.mxu0
    %1002 = vdwg.mxu0
    %s1003 = scalar_lea.vmem [#allocation2], 128
    %v1004 = vld [vmem:[%s1003] sm:$0xf]
    %v1005 = vld [vmem:[%s1003 + $0x4] sm:$0xf]
    %v1006 = vld [vmem:[%s1003 + $0x8] sm:$0xf]
    %v1007 = vld [vmem:[%s1003 + $0xc] sm:$0xf]
    %v1008 = vld [vmem:[%s1003 + $0x10] sm:$0xf]
    %v1009 = vld [vmem:[%s1003 + $0x14] sm:$0xf]
    %v1010 = vld [vmem:[%s1003 + $0x18] sm:$0xf]
    %v1011 = vld [vmem:[%s1003 + $0x1c] sm:$0xf]
    %v1012 = vld [vmem:[%s1003 + $0x20] sm:$0xf]
    %v1013 = vld [vmem:[%s1003 + $0x24] sm:$0xf]
    %v1014 = vld [vmem:[%s1003 + $0x28] sm:$0xf]
    %v1015 = vld [vmem:[%s1003 + $0x2c] sm:$0xf]
    %v1016 = vld [vmem:[%s1003 + $0x30] sm:$0xf]
    %v1017 = vld [vmem:[%s1003 + $0x34] sm:$0xf]
    %v1018 = vld [vmem:[%s1003 + $0x38] sm:$0xf]
    %v1019 = vld [vmem:[%s1003 + $0x3c] sm:$0xf]
    %v1020 = vpack.c.bf16 %v976, %v973
    %v1021 = vpack.c.bf16 %v984, %v981
    %v1022 = vpack.c.bf16 %v992, %v989
    %v1023 = vpack.c.bf16 %v1000, %v997
    %s1024 = scalar_lea.vmem %s6, 3
    %v1025 = vld [vmem:[%s1024] sm:$0x1]
    %v1027 = vlaneseq
    %v1028 = vshrl.u32 %v1027, 7
    %v1029 = vsub.s32 0, %v1028
    %v1030 = vrot.slane %v1025, %v1029
    %v1048 = vunpack.c.l.b16 %v1004
    %v1049 = vunpack.c.l.b16 %v1005
    %v1050 = vunpack.c.l.b16 %v1006
    %v1051 = vunpack.c.l.b16 %v1007
    %v1052 = vunpack.c.l.b16 %v1008
    %v1053 = vunpack.c.l.b16 %v1009
    %v1054 = vunpack.c.l.b16 %v1010
    %v1055 = vunpack.c.l.b16 %v1011
    %v1056 = vunpack.c.l.b16 %v1012
    %v1057 = vunpack.c.l.b16 %v1013
    %v1058 = vunpack.c.l.b16 %v1014
    %v1059 = vunpack.c.l.b16 %v1015
    %v1060 = vunpack.c.l.b16 %v1016
    %v1061 = vunpack.c.l.b16 %v1017
    %v1062 = vunpack.c.l.b16 %v1018
    %v1063 = vunpack.c.l.b16 %v1019
    %v1064 = vpack.c.b16 %v1049, %v1048
    %v1065 = vpack.c.b16 %v1051, %v1050
    %v1066 = vpack.c.b16 %v1053, %v1052
    %v1067 = vpack.c.b16 %v1055, %v1054
    %v1068 = vpack.c.b16 %v1057, %v1056
    %v1069 = vpack.c.b16 %v1059, %v1058
    %v1070 = vpack.c.b16 %v1061, %v1060
    %v1071 = vpack.c.b16 %v1063, %v1062
    %1080 = vmatprep.subr.bf16.mxu0 0
    %1081 = vmatpush1.bf16.msra.mxu0 %v1071
    %1082 = vmatprep.subr.bf16.mxu0 0
    %1083 = vmatpush1.bf16.msra.mxu0 %v1070
    %1084 = vmatprep.subr.bf16.mxu0 0
    %1085 = vmatpush1.bf16.msra.mxu0 %v1069
    %1086 = vmatprep.subr.bf16.mxu0 0
    %1087 = vmatpush1.bf16.msra.mxu0 %v1068
    %1088 = vmatprep.subr.bf16.mxu0 0
    %1089 = vmatpush1.bf16.msra.mxu0 %v1067
    %1090 = vmatprep.subr.bf16.mxu0 0
    %1091 = vmatpush1.bf16.msra.mxu0 %v1066
    %1092 = vmatprep.subr.bf16.mxu0 0
    %1093 = vmatpush1.bf16.msra.mxu0 %v1065
    %1094 = vmatprep.subr.bf16.mxu0 0
    %1095 = vmatpush1.bf16.msra.mxu0 %v1064
    %1096 = vmatprep.subr.bf16.mxu0 0
    %1097 = vmatpush2.bf16.msra.mxu0 0
    %1098 = vmatprep.subr.bf16.mxu0 0
    %1099 = vmatpush2.bf16.msra.mxu0 0
    %1100 = vmatprep.subr.bf16.mxu0 0
    %1101 = vmatpush2.bf16.msra.mxu0 0
    %1102 = vmatprep.subr.bf16.mxu0 0
    %1103 = vmatpush2.bf16.msra.mxu0 0
    %1104 = vmatprep.subr.bf16.mxu0 0
    %1105 = vmatpush2.bf16.msra.mxu0 0
    %1106 = vmatprep.subr.bf16.mxu0 0
    %1107 = vmatpush2.bf16.msra.mxu0 0
    %1108 = vmatprep.subr.bf16.mxu0 0
    %1109 = vmatpush2.bf16.msra.mxu0 0
    %1110 = vmatprep.subr.bf16.mxu0 0
    %1111 = vmatpush2.bf16.msra.mxu0 0
    %1112 = vmatprep.mubr.bf16.mxu0 0
    %1113 = vmatmul.mubr.bf16.gmra.mxu0 %v1020
    %v1114 = vpop.f32.mrf.mxu0
    %v1115 = vadd.f32 %v1030, %v1114
    %v1116 = vpop.f32.mrf.mxu0
    %v1117 = vpop.f32.mrf.mxu0
    %v1118 = vadd.f32 %v1030, %v1117
    %v1119 = vpop.f32.mrf.mxu0
    %1120 = vmatprep.mubr.bf16.mxu0 0
    %1121 = vmatmul.mubr.bf16.gmra.mxu0 %v1021
    %v1122 = vpop.f32.mrf.mxu0
    %v1123 = vadd.f32 %v1030, %v1122
    %v1124 = vpop.f32.mrf.mxu0
    %v1125 = vpop.f32.mrf.mxu0
    %v1126 = vadd.f32 %v1030, %v1125
    %v1127 = vpop.f32.mrf.mxu0
    %1128 = vmatprep.mubr.bf16.mxu0 0
    %1129 = vmatmul.mubr.bf16.gmra.mxu0 %v1022
    %v1130 = vpop.f32.mrf.mxu0
    %v1131 = vadd.f32 %v1030, %v1130
    %v1132 = vpop.f32.mrf.mxu0
    %v1133 = vpop.f32.mrf.mxu0
    %v1134 = vadd.f32 %v1030, %v1133
    %v1135 = vpop.f32.mrf.mxu0
    %1136 = vmatprep.mubr.bf16.mxu0 0
    %1137 = vmatmul.mubr.bf16.gmra.mxu0 %v1023
    %v1138 = vpop.f32.mrf.mxu0
    %v1139 = vadd.f32 %v1030, %v1138
    %v1140 = vpop.f32.mrf.mxu0
    %v1141 = vpop.f32.mrf.mxu0
    %v1142 = vadd.f32 %v1030, %v1141
    %v1143 = vpop.f32.mrf.mxu0
    %1144 = vdwg.mxu0
    %v1145 = vmax.f32 %v1115, 0.0
    %v1146 = vmax.f32 %v1118, 0.0
    %v1147 = vmax.f32 %v1123, 0.0
    %v1148 = vmax.f32 %v1126, 0.0
    %v1149 = vmax.f32 %v1131, 0.0
    %v1150 = vmax.f32 %v1134, 0.0
    %v1151 = vmax.f32 %v1139, 0.0
    %v1152 = vmax.f32 %v1142, 0.0
    %s1153 = scalar_lea.vmem [#allocation2], 192
    %v1154 = vld [vmem:[%s1153] sm:$0xf]
    %v1155 = vld [vmem:[%s1153 + $0x4] sm:$0xf]
    %v1156 = vld [vmem:[%s1153 + $0x8] sm:$0xf]
    %v1157 = vld [vmem:[%s1153 + $0xc] sm:$0xf]
    %v1158 = vld [vmem:[%s1153 + $0x10] sm:$0xf]
    %v1159 = vld [vmem:[%s1153 + $0x14] sm:$0xf]
    %v1160 = vld [vmem:[%s1153 + $0x18] sm:$0xf]
    %v1161 = vld [vmem:[%s1153 + $0x1c] sm:$0xf]
    %v1162 = vld [vmem:[%s1153 + $0x20] sm:$0xf]
    %v1163 = vld [vmem:[%s1153 + $0x24] sm:$0xf]
    %v1164 = vld [vmem:[%s1153 + $0x28] sm:$0xf]
    %v1165 = vld [vmem:[%s1153 + $0x2c] sm:$0xf]
    %v1166 = vld [vmem:[%s1153 + $0x30] sm:$0xf]
    %v1167 = vld [vmem:[%s1153 + $0x34] sm:$0xf]
    %v1168 = vld [vmem:[%s1153 + $0x38] sm:$0xf]
    %v1169 = vld [vmem:[%s1153 + $0x3c] sm:$0xf]
    %v1170 = vpack.c.bf16 %v1146, %v1145
    %v1171 = vpack.c.bf16 %v1148, %v1147
    %v1172 = vpack.c.bf16 %v1150, %v1149
    %v1173 = vpack.c.bf16 %v1152, %v1151
    %s1174 = scalar_lea.vmem %s6, 4
    %v1175 = vld [vmem:[%s1174] sm:$0x1]
    %v1177 = vlaneseq
    %v1178 = vshrl.u32 %v1177, 7
    %v1179 = vsub.s32 0, %v1178
    %v1180 = vrot.slane %v1175, %v1179
    %v1198 = vunpack.c.l.b16 %v1154
    %v1199 = vunpack.c.l.b16 %v1155
    %v1200 = vunpack.c.l.b16 %v1156
    %v1201 = vunpack.c.l.b16 %v1157
    %v1202 = vunpack.c.l.b16 %v1158
    %v1203 = vunpack.c.l.b16 %v1159
    %v1204 = vunpack.c.l.b16 %v1160
    %v1205 = vunpack.c.l.b16 %v1161
    %v1206 = vunpack.c.l.b16 %v1162
    %v1207 = vunpack.c.l.b16 %v1163
    %v1208 = vunpack.c.l.b16 %v1164
    %v1209 = vunpack.c.l.b16 %v1165
    %v1210 = vunpack.c.l.b16 %v1166
    %v1211 = vunpack.c.l.b16 %v1167
    %v1212 = vunpack.c.l.b16 %v1168
    %v1213 = vunpack.c.l.b16 %v1169
    %v1214 = vpack.c.b16 %v1199, %v1198
    %v1215 = vpack.c.b16 %v1201, %v1200
    %v1216 = vpack.c.b16 %v1203, %v1202
    %v1217 = vpack.c.b16 %v1205, %v1204
    %v1218 = vpack.c.b16 %v1207, %v1206
    %v1219 = vpack.c.b16 %v1209, %v1208
    %v1220 = vpack.c.b16 %v1211, %v1210
    %v1221 = vpack.c.b16 %v1213, %v1212
    %1230 = vmatprep.subr.bf16.mxu0 0
    %1231 = vmatpush1.bf16.msra.mxu0 %v1221
    %1232 = vmatprep.subr.bf16.mxu0 0
    %1233 = vmatpush1.bf16.msra.mxu0 %v1220
    %1234 = vmatprep.subr.bf16.mxu0 0
    %1235 = vmatpush1.bf16.msra.mxu0 %v1219
    %1236 = vmatprep.subr.bf16.mxu0 0
    %1237 = vmatpush1.bf16.msra.mxu0 %v1218
    %1238 = vmatprep.subr.bf16.mxu0 0
    %1239 = vmatpush1.bf16.msra.mxu0 %v1217
    %1240 = vmatprep.subr.bf16.mxu0 0
    %1241 = vmatpush1.bf16.msra.mxu0 %v1216
    %1242 = vmatprep.subr.bf16.mxu0 0
    %1243 = vmatpush1.bf16.msra.mxu0 %v1215
    %1244 = vmatprep.subr.bf16.mxu0 0
    %1245 = vmatpush1.bf16.msra.mxu0 %v1214
    %1246 = vmatprep.subr.bf16.mxu0 0
    %1247 = vmatpush2.bf16.msra.mxu0 0
    %1248 = vmatprep.subr.bf16.mxu0 0
    %1249 = vmatpush2.bf16.msra.mxu0 0
    %1250 = vmatprep.subr.bf16.mxu0 0
    %1251 = vmatpush2.bf16.msra.mxu0 0
    %1252 = vmatprep.subr.bf16.mxu0 0
    %1253 = vmatpush2.bf16.msra.mxu0 0
    %1254 = vmatprep.subr.bf16.mxu0 0
    %1255 = vmatpush2.bf16.msra.mxu0 0
    %1256 = vmatprep.subr.bf16.mxu0 0
    %1257 = vmatpush2.bf16.msra.mxu0 0
    %1258 = vmatprep.subr.bf16.mxu0 0
    %1259 = vmatpush2.bf16.msra.mxu0 0
    %1260 = vmatprep.subr.bf16.mxu0 0
    %1261 = vmatpush2.bf16.msra.mxu0 0
    %1262 = vmatprep.mubr.bf16.mxu0 0
    %1263 = vmatmul.mubr.bf16.gmra.mxu0 %v1170
    %v1264 = vpop.f32.mrf.mxu0
    %v1265 = vadd.f32 %v1180, %v1264
    %v1266 = vpop.f32.mrf.mxu0
    %v1267 = vpop.f32.mrf.mxu0
    %v1268 = vadd.f32 %v1180, %v1267
    %v1269 = vpop.f32.mrf.mxu0
    %1270 = vmatprep.mubr.bf16.mxu0 0
    %1271 = vmatmul.mubr.bf16.gmra.mxu0 %v1171
    %v1272 = vpop.f32.mrf.mxu0
    %v1273 = vadd.f32 %v1180, %v1272
    %v1274 = vpop.f32.mrf.mxu0
    %v1275 = vpop.f32.mrf.mxu0
    %v1276 = vadd.f32 %v1180, %v1275
    %v1277 = vpop.f32.mrf.mxu0
    %1278 = vmatprep.mubr.bf16.mxu0 0
    %1279 = vmatmul.mubr.bf16.gmra.mxu0 %v1172
    %v1280 = vpop.f32.mrf.mxu0
    %v1281 = vadd.f32 %v1180, %v1280
    %v1282 = vpop.f32.mrf.mxu0
    %v1283 = vpop.f32.mrf.mxu0
    %v1284 = vadd.f32 %v1180, %v1283
    %v1285 = vpop.f32.mrf.mxu0
    %1286 = vmatprep.mubr.bf16.mxu0 0
    %1287 = vmatmul.mubr.bf16.gmra.mxu0 %v1173
    %v1288 = vpop.f32.mrf.mxu0
    %v1289 = vadd.f32 %v1180, %v1288
    %v1290 = vpop.f32.mrf.mxu0
    %v1291 = vpop.f32.mrf.mxu0
    %v1292 = vadd.f32 %v1180, %v1291
    %v1293 = vpop.f32.mrf.mxu0
    %1294 = vdwg.mxu0
    %vm1295 = vcmp.gt.f32.partialorder %v1265, 0.0
    %vm1296 = vcmp.gt.f32.partialorder %v1268, 0.0
    %vm1297 = vcmp.gt.f32.partialorder %v1273, 0.0
    %vm1298 = vcmp.gt.f32.partialorder %v1276, 0.0
    %vm1299 = vcmp.gt.f32.partialorder %v1281, 0.0
    %vm1300 = vcmp.gt.f32.partialorder %v1284, 0.0
    %vm1301 = vcmp.gt.f32.partialorder %v1289, 0.0
    %vm1302 = vcmp.gt.f32.partialorder %v1292, 0.0
    %v1303 = vmul.f32 %v1265, 0.1
    %v1304 = vmul.f32 %v1268, 0.1
    %v1305 = vmul.f32 %v1273, 0.1
    %v1306 = vmul.f32 %v1276, 0.1
    %v1307 = vmul.f32 %v1281, 0.1
    %v1308 = vmul.f32 %v1284, 0.1
    %v1309 = vmul.f32 %v1289, 0.1
    %v1310 = vmul.f32 %v1292, 0.1
    %v1311 = vsel %vm1295, %v1265, %v1303
    %v1312 = vsel %vm1296, %v1268, %v1304
    %v1313 = vsel %vm1297, %v1273, %v1305
    %v1314 = vsel %vm1298, %v1276, %v1306
    %v1315 = vsel %vm1299, %v1281, %v1307
    %v1316 = vsel %vm1300, %v1284, %v1308
    %v1317 = vsel %vm1301, %v1289, %v1309
    %v1318 = vsel %vm1302, %v1292, %v1310
    %v1319 = vpack.c.bf16 %v1312, %v1311
    %v1320 = vpack.c.bf16 %v1314, %v1313
    %v1321 = vpack.c.bf16 %v1316, %v1315
    %v1322 = vpack.c.bf16 %v1318, %v1317
    %1323 = vmatprep.subr.bf16.mxu0 0
    %1324 = vmatpush1.bf16.msra.mxu0 0
    %1325 = vmatprep.subr.bf16.mxu0 0
    %1326 = vmatpush1.bf16.msra.mxu0 0
    %1327 = vmatprep.subr.bf16.mxu0 0
    %1328 = vmatpush1.bf16.msra.mxu0 0
    %1329 = vmatprep.subr.bf16.mxu0 0
    %1330 = vmatpush1.bf16.msra.mxu0 0
    %1331 = vmatprep.subr.bf16.mxu0 0
    %1332 = vmatpush1.bf16.msra.mxu0 %v1322
    %1333 = vmatprep.subr.bf16.mxu0 0
    %1334 = vmatpush1.bf16.msra.mxu0 %v1321
    %1335 = vmatprep.subr.bf16.mxu0 0
    %1336 = vmatpush1.bf16.msra.mxu0 %v1320
    %1337 = vmatprep.subr.bf16.mxu0 0
    %1338 = vmatpush1.bf16.msra.mxu0 %v1319
    %1339 = vmatprep.subr.bf16.mxu0 0
    %1340 = vmatpush2.bf16.msra.mxu0 0
    %1341 = vmatprep.subr.bf16.mxu0 0
    %1342 = vmatpush2.bf16.msra.mxu0 0
    %1343 = vmatprep.subr.bf16.mxu0 0
    %1344 = vmatpush2.bf16.msra.mxu0 0
    %1345 = vmatprep.subr.bf16.mxu0 0
    %1346 = vmatpush2.bf16.msra.mxu0 0
    %1347 = vmatprep.subr.bf16.mxu0 0
    %1348 = vmatpush2.bf16.msra.mxu0 0
    %1349 = vmatprep.subr.bf16.mxu0 0
    %1350 = vmatpush2.bf16.msra.mxu0 0
    %1351 = vmatprep.subr.bf16.mxu0 0
    %1352 = vmatpush2.bf16.msra.mxu0 0
    %1353 = vmatprep.subr.bf16.mxu0 0
    %1354 = vmatpush2.bf16.msra.mxu0 0
    %1355 = vmatprep.mubr.bf16.mxu0 0
    %1356 = vmatmul.mubr.bf16.gmra.mxu0 %v579
    %v1357 = vpop.f32.mrf.mxu0
    %v1358 = vadd.f32 %v850, %v1357
    %v1359 = vpop.f32.mrf.mxu0
    %v1360 = vpop.f32.mrf.mxu0
    %v1361 = vpop.f32.mrf.mxu0
    %1362 = vdwg.mxu0
    %s1363 = scalar_lea.vmem [#allocation2], 512
    %v1364 = vld [vmem:[%s1363] sm:$0xf]
    %v1365 = vld [vmem:[%s1363 + $0x4] sm:$0xf]
    %v1366 = vld [vmem:[%s1363 + $0x8] sm:$0xf]
    %v1367 = vld [vmem:[%s1363 + $0xc] sm:$0xf]
    %v1368 = vld [vmem:[%s1363 + $0x10] sm:$0xf]
    %v1369 = vld [vmem:[%s1363 + $0x14] sm:$0xf]
    %v1370 = vld [vmem:[%s1363 + $0x18] sm:$0xf]
    %v1371 = vld [vmem:[%s1363 + $0x1c] sm:$0xf]
    %v1372 = vld [vmem:[%s1363 + $0x20] sm:$0xf]
    %v1373 = vld [vmem:[%s1363 + $0x24] sm:$0xf]
    %v1374 = vld [vmem:[%s1363 + $0x28] sm:$0xf]
    %v1375 = vld [vmem:[%s1363 + $0x2c] sm:$0xf]
    %v1376 = vld [vmem:[%s1363 + $0x30] sm:$0xf]
    %v1377 = vld [vmem:[%s1363 + $0x34] sm:$0xf]
    %v1378 = vld [vmem:[%s1363 + $0x38] sm:$0xf]
    %v1379 = vld [vmem:[%s1363 + $0x3c] sm:$0xf]
    %v1380 = vpack.c.bf16 %v1358, %v1358
    %s1381 = scalar_lea.vmem %s6, 9
    %v1382 = vld [vmem:[%s1381] sm:$0x1]
    %v1384 = vlaneseq
    %v1385 = vshrl.u32 %v1384, 7
    %v1386 = vsub.s32 0, %v1385
    %v1387 = vrot.slane %v1382, %v1386
    %v1405 = vunpack.c.l.b16 %v1364
    %v1406 = vunpack.c.l.b16 %v1365
    %v1407 = vunpack.c.l.b16 %v1366
    %v1408 = vunpack.c.l.b16 %v1367
    %v1409 = vunpack.c.l.b16 %v1368
    %v1410 = vunpack.c.l.b16 %v1369
    %v1411 = vunpack.c.l.b16 %v1370
    %v1412 = vunpack.c.l.b16 %v1371
    %v1413 = vunpack.c.l.b16 %v1372
    %v1414 = vunpack.c.l.b16 %v1373
    %v1415 = vunpack.c.l.b16 %v1374
    %v1416 = vunpack.c.l.b16 %v1375
    %v1417 = vunpack.c.l.b16 %v1376
    %v1418 = vunpack.c.l.b16 %v1377
    %v1419 = vunpack.c.l.b16 %v1378
    %v1420 = vunpack.c.l.b16 %v1379
    %v1421 = vpack.c.b16 %v1406, %v1405
    %v1422 = vpack.c.b16 %v1408, %v1407
    %v1423 = vpack.c.b16 %v1410, %v1409
    %v1424 = vpack.c.b16 %v1412, %v1411
    %v1425 = vpack.c.b16 %v1414, %v1413
    %v1426 = vpack.c.b16 %v1416, %v1415
    %v1427 = vpack.c.b16 %v1418, %v1417
    %v1428 = vpack.c.b16 %v1420, %v1419
    %1437 = vmatprep.subr.bf16.mxu0 0
    %1438 = vmatpush1.bf16.msra.mxu0 %v1428
    %1439 = vmatprep.subr.bf16.mxu0 0
    %1440 = vmatpush1.bf16.msra.mxu0 %v1427
    %1441 = vmatprep.subr.bf16.mxu0 0
    %1442 = vmatpush1.bf16.msra.mxu0 %v1426
    %1443 = vmatprep.subr.bf16.mxu0 0
    %1444 = vmatpush1.bf16.msra.mxu0 %v1425
    %1445 = vmatprep.subr.bf16.mxu0 0
    %1446 = vmatpush1.bf16.msra.mxu0 %v1424
    %1447 = vmatprep.subr.bf16.mxu0 0
    %1448 = vmatpush1.bf16.msra.mxu0 %v1423
    %1449 = vmatprep.subr.bf16.mxu0 0
    %1450 = vmatpush1.bf16.msra.mxu0 %v1422
    %1451 = vmatprep.subr.bf16.mxu0 0
    %1452 = vmatpush1.bf16.msra.mxu0 %v1421
    %1453 = vmatprep.subr.bf16.mxu0 0
    %1454 = vmatpush2.bf16.msra.mxu0 0
    %1455 = vmatprep.subr.bf16.mxu0 0
    %1456 = vmatpush2.bf16.msra.mxu0 0
    %1457 = vmatprep.subr.bf16.mxu0 0
    %1458 = vmatpush2.bf16.msra.mxu0 0
    %1459 = vmatprep.subr.bf16.mxu0 0
    %1460 = vmatpush2.bf16.msra.mxu0 0
    %1461 = vmatprep.subr.bf16.mxu0 0
    %1462 = vmatpush2.bf16.msra.mxu0 0
    %1463 = vmatprep.subr.bf16.mxu0 0
    %1464 = vmatpush2.bf16.msra.mxu0 0
    %1465 = vmatprep.subr.bf16.mxu0 0
    %1466 = vmatpush2.bf16.msra.mxu0 0
    %1467 = vmatprep.subr.bf16.mxu0 0
    %1468 = vmatpush2.bf16.msra.mxu0 0
    %1469 = vmatprep.mubr.bf16.mxu0 0
    %1470 = vmatmul.mubr.bf16.gmra.mxu0 %v1380
    %v1471 = vpop.f32.mrf.mxu0
    %v1472 = vadd.f32 %v1387, %v1471
    %v1473 = vpop.f32.mrf.mxu0
    %v1474 = vpop.f32.mrf.mxu0
    %v1475 = vpop.f32.mrf.mxu0
    %1476 = vdwg.mxu0
    %v1477 = vmax.f32 %v1472, 0.0
    %s1478 = scalar_lea.vmem [#allocation2], 576
    %v1479 = vld [vmem:[%s1478] sm:$0xf]
    %v1480 = vld [vmem:[%s1478 + $0x4] sm:$0xf]
    %v1481 = vld [vmem:[%s1478 + $0x8] sm:$0xf]
    %v1482 = vld [vmem:[%s1478 + $0xc] sm:$0xf]
    %v1483 = vld [vmem:[%s1478 + $0x10] sm:$0xf]
    %v1484 = vld [vmem:[%s1478 + $0x14] sm:$0xf]
    %v1485 = vld [vmem:[%s1478 + $0x18] sm:$0xf]
    %v1486 = vld [vmem:[%s1478 + $0x1c] sm:$0xf]
    %v1487 = vld [vmem:[%s1478 + $0x20] sm:$0xf]
    %v1488 = vld [vmem:[%s1478 + $0x24] sm:$0xf]
    %v1489 = vld [vmem:[%s1478 + $0x28] sm:$0xf]
    %v1490 = vld [vmem:[%s1478 + $0x2c] sm:$0xf]
    %v1491 = vld [vmem:[%s1478 + $0x30] sm:$0xf]
    %v1492 = vld [vmem:[%s1478 + $0x34] sm:$0xf]
    %v1493 = vld [vmem:[%s1478 + $0x38] sm:$0xf]
    %v1494 = vld [vmem:[%s1478 + $0x3c] sm:$0xf]
    %v1495 = vpack.c.bf16 %v1477, %v1477
    %s1496 = scalar_lea.vmem %s6, 10
    %v1497 = vld [vmem:[%s1496] sm:$0x1]
    %v1499 = vlaneseq
    %v1500 = vshrl.u32 %v1499, 7
    %v1501 = vsub.s32 0, %v1500
    %v1502 = vrot.slane %v1497, %v1501
    %v1520 = vunpack.c.l.b16 %v1479
    %v1521 = vunpack.c.l.b16 %v1480
    %v1522 = vunpack.c.l.b16 %v1481
    %v1523 = vunpack.c.l.b16 %v1482
    %v1524 = vunpack.c.l.b16 %v1483
    %v1525 = vunpack.c.l.b16 %v1484
    %v1526 = vunpack.c.l.b16 %v1485
    %v1527 = vunpack.c.l.b16 %v1486
    %v1528 = vunpack.c.l.b16 %v1487
    %v1529 = vunpack.c.l.b16 %v1488
    %v1530 = vunpack.c.l.b16 %v1489
    %v1531 = vunpack.c.l.b16 %v1490
    %v1532 = vunpack.c.l.b16 %v1491
    %v1533 = vunpack.c.l.b16 %v1492
    %v1534 = vunpack.c.l.b16 %v1493
    %v1535 = vunpack.c.l.b16 %v1494
    %v1536 = vpack.c.b16 %v1521, %v1520
    %v1537 = vpack.c.b16 %v1523, %v1522
    %v1538 = vpack.c.b16 %v1525, %v1524
    %v1539 = vpack.c.b16 %v1527, %v1526
    %v1540 = vpack.c.b16 %v1529, %v1528
    %v1541 = vpack.c.b16 %v1531, %v1530
    %v1542 = vpack.c.b16 %v1533, %v1532
    %v1543 = vpack.c.b16 %v1535, %v1534
    %1552 = vmatprep.subr.bf16.mxu0 0
    %1553 = vmatpush1.bf16.msra.mxu0 %v1543
    %1554 = vmatprep.subr.bf16.mxu0 0
    %1555 = vmatpush1.bf16.msra.mxu0 %v1542
    %1556 = vmatprep.subr.bf16.mxu0 0
    %1557 = vmatpush1.bf16.msra.mxu0 %v1541
    %1558 = vmatprep.subr.bf16.mxu0 0
    %1559 = vmatpush1.bf16.msra.mxu0 %v1540
    %1560 = vmatprep.subr.bf16.mxu0 0
    %1561 = vmatpush1.bf16.msra.mxu0 %v1539
    %1562 = vmatprep.subr.bf16.mxu0 0
    %1563 = vmatpush1.bf16.msra.mxu0 %v1538
    %1564 = vmatprep.subr.bf16.mxu0 0
    %1565 = vmatpush1.bf16.msra.mxu0 %v1537
    %1566 = vmatprep.subr.bf16.mxu0 0
    %1567 = vmatpush1.bf16.msra.mxu0 %v1536
    %1568 = vmatprep.subr.bf16.mxu0 0
    %1569 = vmatpush2.bf16.msra.mxu0 0
    %1570 = vmatprep.subr.bf16.mxu0 0
    %1571 = vmatpush2.bf16.msra.mxu0 0
    %1572 = vmatprep.subr.bf16.mxu0 0
    %1573 = vmatpush2.bf16.msra.mxu0 0
    %1574 = vmatprep.subr.bf16.mxu0 0
    %1575 = vmatpush2.bf16.msra.mxu0 0
    %1576 = vmatprep.subr.bf16.mxu0 0
    %1577 = vmatpush2.bf16.msra.mxu0 0
    %1578 = vmatprep.subr.bf16.mxu0 0
    %1579 = vmatpush2.bf16.msra.mxu0 0
    %1580 = vmatprep.subr.bf16.mxu0 0
    %1581 = vmatpush2.bf16.msra.mxu0 0
    %1582 = vmatprep.subr.bf16.mxu0 0
    %1583 = vmatpush2.bf16.msra.mxu0 0
    %1584 = vmatprep.mubr.bf16.mxu0 0
    %1585 = vmatmul.mubr.bf16.gmra.mxu0 %v1495
    %v1586 = vpop.f32.mrf.mxu0
    %v1587 = vadd.f32 %v1502, %v1586
    %v1588 = vpop.f32.mrf.mxu0
    %v1589 = vpop.f32.mrf.mxu0
    %v1590 = vpop.f32.mrf.mxu0
    %1591 = vdwg.mxu0
    %v1592 = vmax.f32 %v1587, 0.0
    %v1593 = vpack.c.bf16 %v1592, %v1592
    %v1595 = vsel %vm869, %v1593, 0
    %1597 = vmatprep.subr.bf16.mxu0 0
    %1598 = vmatpush1.bf16.msra.mxu0 0
    %1599 = vmatprep.subr.bf16.mxu0 0
    %1600 = vmatpush1.bf16.msra.mxu0 0
    %1601 = vmatprep.subr.bf16.mxu0 0
    %1602 = vmatpush1.bf16.msra.mxu0 0
    %1603 = vmatprep.subr.bf16.mxu0 0
    %1604 = vmatpush1.bf16.msra.mxu0 0
    %1605 = vmatprep.subr.bf16.mxu0 0
    %1606 = vmatpush1.bf16.msra.mxu0 0
    %1607 = vmatprep.subr.bf16.mxu0 0
    %1608 = vmatpush1.bf16.msra.mxu0 0
    %1609 = vmatprep.subr.bf16.mxu0 0
    %1610 = vmatpush1.bf16.msra.mxu0 0
    %1611 = vmatprep.subr.bf16.mxu0 0
    %1612 = vmatpush1.bf16.msra.mxu0 %v1595
    %1613 = vmatprep.subr.bf16.mxu0 0
    %1614 = vmatpush2.bf16.msra.mxu0 0
    %1615 = vmatprep.subr.bf16.mxu0 0
    %1616 = vmatpush2.bf16.msra.mxu0 0
    %1617 = vmatprep.subr.bf16.mxu0 0
    %1618 = vmatpush2.bf16.msra.mxu0 0
    %1619 = vmatprep.subr.bf16.mxu0 0
    %1620 = vmatpush2.bf16.msra.mxu0 0
    %1621 = vmatprep.subr.bf16.mxu0 0
    %1622 = vmatpush2.bf16.msra.mxu0 0
    %1623 = vmatprep.subr.bf16.mxu0 0
    %1624 = vmatpush2.bf16.msra.mxu0 0
    %1625 = vmatprep.subr.bf16.mxu0 0
    %1626 = vmatpush2.bf16.msra.mxu0 0
    %1627 = vmatprep.subr.bf16.mxu0 0
    %1628 = vmatpush2.bf16.msra.mxu0 0
    %1629 = vmatprep.mubr.bf16.mxu0 0
    %1630 = vmatmul.mubr.bf16.gmra.mxu0 %v858
    %v1631 = vpop.f32.mrf.mxu0
    %v1632 = vadd.f32 0.0, %v1631
    %v1633 = vpop.f32.mrf.mxu0
    %v1634 = vpop.f32.mrf.mxu0
    %v1635 = vadd.f32 0.0, %v1634
    %v1636 = vpop.f32.mrf.mxu0
    %1637 = vmatprep.mubr.bf16.mxu0 0
    %1638 = vmatmul.mubr.bf16.gmra.mxu0 %v861
    %v1639 = vpop.f32.mrf.mxu0
    %v1640 = vadd.f32 0.0, %v1639
    %v1641 = vpop.f32.mrf.mxu0
    %v1642 = vpop.f32.mrf.mxu0
    %v1643 = vadd.f32 0.0, %v1642
    %v1644 = vpop.f32.mrf.mxu0
    %1645 = vmatprep.mubr.bf16.mxu0 0
    %1646 = vmatmul.mubr.bf16.gmra.mxu0 %v864
    %v1647 = vpop.f32.mrf.mxu0
    %v1648 = vadd.f32 0.0, %v1647
    %v1649 = vpop.f32.mrf.mxu0
    %v1650 = vpop.f32.mrf.mxu0
    %v1651 = vadd.f32 0.0, %v1650
    %v1652 = vpop.f32.mrf.mxu0
    %1653 = vmatprep.mubr.bf16.mxu0 0
    %1654 = vmatmul.mubr.bf16.gmra.mxu0 %v867
    %v1655 = vpop.f32.mrf.mxu0
    %v1656 = vadd.f32 0.0, %v1655
    %v1657 = vpop.f32.mrf.mxu0
    %v1658 = vpop.f32.mrf.mxu0
    %v1659 = vadd.f32 0.0, %v1658
    %v1660 = vpop.f32.mrf.mxu0
    %1661 = vdwg.mxu0
    %1662 = vmatprep.subr.bf16.mxu0 0
    %1663 = vmatpush1.bf16.msra.mxu0 0
    %1664 = vmatprep.subr.bf16.mxu0 0
    %1665 = vmatpush1.bf16.msra.mxu0 0
    %1666 = vmatprep.subr.bf16.mxu0 0
    %1667 = vmatpush1.bf16.msra.mxu0 0
    %1668 = vmatprep.subr.bf16.mxu0 0
    %1669 = vmatpush1.bf16.msra.mxu0 0
    %1670 = vmatprep.subr.bf16.mxu0 0
    %1671 = vmatpush1.bf16.msra.mxu0 %v1322
    %1672 = vmatprep.subr.bf16.mxu0 0
    %1673 = vmatpush1.bf16.msra.mxu0 %v1321
    %1674 = vmatprep.subr.bf16.mxu0 0
    %1675 = vmatpush1.bf16.msra.mxu0 %v1320
    %1676 = vmatprep.subr.bf16.mxu0 0
    %1677 = vmatpush1.bf16.msra.mxu0 %v1319
    %1678 = vmatprep.subr.bf16.mxu0 0
    %1679 = vmatpush2.bf16.msra.mxu0 0
    %1680 = vmatprep.subr.bf16.mxu0 0
    %1681 = vmatpush2.bf16.msra.mxu0 0
    %1682 = vmatprep.subr.bf16.mxu0 0
    %1683 = vmatpush2.bf16.msra.mxu0 0
    %1684 = vmatprep.subr.bf16.mxu0 0
    %1685 = vmatpush2.bf16.msra.mxu0 0
    %1686 = vmatprep.subr.bf16.mxu0 0
    %1687 = vmatpush2.bf16.msra.mxu0 0
    %1688 = vmatprep.subr.bf16.mxu0 0
    %1689 = vmatpush2.bf16.msra.mxu0 0
    %1690 = vmatprep.subr.bf16.mxu0 0
    %1691 = vmatpush2.bf16.msra.mxu0 0
    %1692 = vmatprep.subr.bf16.mxu0 0
    %1693 = vmatpush2.bf16.msra.mxu0 0
    %1694 = vmatprep.mubr.bf16.mxu0 0
    %1695 = vmatmul.mubr.bf16.gmra.mxu0 %v182
    %v1696 = vpop.f32.mrf.mxu0
    %v1697 = vadd.f32 %v1632, %v1696
    %v1698 = vpop.f32.mrf.mxu0
    %v1699 = vpop.f32.mrf.mxu0
    %v1700 = vadd.f32 %v1635, %v1699
    %v1701 = vpop.f32.mrf.mxu0
    %1702 = vmatprep.mubr.bf16.mxu0 0
    %1703 = vmatmul.mubr.bf16.gmra.mxu0 %v185
    %v1704 = vpop.f32.mrf.mxu0
    %v1705 = vadd.f32 %v1640, %v1704
    %v1706 = vpop.f32.mrf.mxu0
    %v1707 = vpop.f32.mrf.mxu0
    %v1708 = vadd.f32 %v1643, %v1707
    %v1709 = vpop.f32.mrf.mxu0
    %1710 = vmatprep.mubr.bf16.mxu0 0
    %1711 = vmatmul.mubr.bf16.gmra.mxu0 %v188
    %v1712 = vpop.f32.mrf.mxu0
    %v1713 = vadd.f32 %v1648, %v1712
    %v1714 = vpop.f32.mrf.mxu0
    %v1715 = vpop.f32.mrf.mxu0
    %v1716 = vadd.f32 %v1651, %v1715
    %v1717 = vpop.f32.mrf.mxu0
    %1718 = vmatprep.mubr.bf16.mxu0 0
    %1719 = vmatmul.mubr.bf16.gmra.mxu0 %v191
    %v1720 = vpop.f32.mrf.mxu0
    %v1721 = vadd.f32 %v1656, %v1720
    %v1722 = vpop.f32.mrf.mxu0
    %v1723 = vpop.f32.mrf.mxu0
    %v1724 = vadd.f32 %v1659, %v1723
    %v1725 = vpop.f32.mrf.mxu0
    %1726 = vdwg.mxu0
    %s1727 = scalar_lea.vmem [#allocation2], 256
    %v1728 = vld [vmem:[%s1727] sm:$0xf]
    %v1729 = vld [vmem:[%s1727 + $0x4] sm:$0xf]
    %v1730 = vld [vmem:[%s1727 + $0x8] sm:$0xf]
    %v1731 = vld [vmem:[%s1727 + $0xc] sm:$0xf]
    %v1732 = vld [vmem:[%s1727 + $0x10] sm:$0xf]
    %v1733 = vld [vmem:[%s1727 + $0x14] sm:$0xf]
    %v1734 = vld [vmem:[%s1727 + $0x18] sm:$0xf]
    %v1735 = vld [vmem:[%s1727 + $0x1c] sm:$0xf]
    %v1736 = vld [vmem:[%s1727 + $0x20] sm:$0xf]
    %v1737 = vld [vmem:[%s1727 + $0x24] sm:$0xf]
    %v1738 = vld [vmem:[%s1727 + $0x28] sm:$0xf]
    %v1739 = vld [vmem:[%s1727 + $0x2c] sm:$0xf]
    %v1740 = vld [vmem:[%s1727 + $0x30] sm:$0xf]
    %v1741 = vld [vmem:[%s1727 + $0x34] sm:$0xf]
    %v1742 = vld [vmem:[%s1727 + $0x38] sm:$0xf]
    %v1743 = vld [vmem:[%s1727 + $0x3c] sm:$0xf]
    %v1744 = vpack.c.bf16 %v1700, %v1697
    %v1745 = vpack.c.bf16 %v1708, %v1705
    %v1746 = vpack.c.bf16 %v1716, %v1713
    %v1747 = vpack.c.bf16 %v1724, %v1721
    %s1748 = scalar_lea.vmem %s6, 5
    %v1749 = vld [vmem:[%s1748] sm:$0x1]
    %v1751 = vlaneseq
    %v1752 = vshrl.u32 %v1751, 7
    %v1753 = vsub.s32 0, %v1752
    %v1754 = vrot.slane %v1749, %v1753
    %v1772 = vunpack.c.l.b16 %v1728
    %v1773 = vunpack.c.l.b16 %v1729
    %v1774 = vunpack.c.l.b16 %v1730
    %v1775 = vunpack.c.l.b16 %v1731
    %v1776 = vunpack.c.l.b16 %v1732
    %v1777 = vunpack.c.l.b16 %v1733
    %v1778 = vunpack.c.l.b16 %v1734
    %v1779 = vunpack.c.l.b16 %v1735
    %v1780 = vunpack.c.l.b16 %v1736
    %v1781 = vunpack.c.l.b16 %v1737
    %v1782 = vunpack.c.l.b16 %v1738
    %v1783 = vunpack.c.l.b16 %v1739
    %v1784 = vunpack.c.l.b16 %v1740
    %v1785 = vunpack.c.l.b16 %v1741
    %v1786 = vunpack.c.l.b16 %v1742
    %v1787 = vunpack.c.l.b16 %v1743
    %v1788 = vpack.c.b16 %v1773, %v1772
    %v1789 = vpack.c.b16 %v1775, %v1774
    %v1790 = vpack.c.b16 %v1777, %v1776
    %v1791 = vpack.c.b16 %v1779, %v1778
    %v1792 = vpack.c.b16 %v1781, %v1780
    %v1793 = vpack.c.b16 %v1783, %v1782
    %v1794 = vpack.c.b16 %v1785, %v1784
    %v1795 = vpack.c.b16 %v1787, %v1786
    %1804 = vmatprep.subr.bf16.mxu0 0
    %1805 = vmatpush1.bf16.msra.mxu0 %v1795
    %1806 = vmatprep.subr.bf16.mxu0 0
    %1807 = vmatpush1.bf16.msra.mxu0 %v1794
    %1808 = vmatprep.subr.bf16.mxu0 0
    %1809 = vmatpush1.bf16.msra.mxu0 %v1793
    %1810 = vmatprep.subr.bf16.mxu0 0
    %1811 = vmatpush1.bf16.msra.mxu0 %v1792
    %1812 = vmatprep.subr.bf16.mxu0 0
    %1813 = vmatpush1.bf16.msra.mxu0 %v1791
    %1814 = vmatprep.subr.bf16.mxu0 0
    %1815 = vmatpush1.bf16.msra.mxu0 %v1790
    %1816 = vmatprep.subr.bf16.mxu0 0
    %1817 = vmatpush1.bf16.msra.mxu0 %v1789
    %1818 = vmatprep.subr.bf16.mxu0 0
    %1819 = vmatpush1.bf16.msra.mxu0 %v1788
    %1820 = vmatprep.subr.bf16.mxu0 0
    %1821 = vmatpush2.bf16.msra.mxu0 0
    %1822 = vmatprep.subr.bf16.mxu0 0
    %1823 = vmatpush2.bf16.msra.mxu0 0
    %1824 = vmatprep.subr.bf16.mxu0 0
    %1825 = vmatpush2.bf16.msra.mxu0 0
    %1826 = vmatprep.subr.bf16.mxu0 0
    %1827 = vmatpush2.bf16.msra.mxu0 0
    %1828 = vmatprep.subr.bf16.mxu0 0
    %1829 = vmatpush2.bf16.msra.mxu0 0
    %1830 = vmatprep.subr.bf16.mxu0 0
    %1831 = vmatpush2.bf16.msra.mxu0 0
    %1832 = vmatprep.subr.bf16.mxu0 0
    %1833 = vmatpush2.bf16.msra.mxu0 0
    %1834 = vmatprep.subr.bf16.mxu0 0
    %1835 = vmatpush2.bf16.msra.mxu0 0
    %1836 = vmatprep.mubr.bf16.mxu0 0
    %1837 = vmatmul.mubr.bf16.gmra.mxu0 %v1744
    %v1838 = vpop.f32.mrf.mxu0
    %v1839 = vadd.f32 %v1754, %v1838
    %v1840 = vpop.f32.mrf.mxu0
    %v1841 = vpop.f32.mrf.mxu0
    %v1842 = vadd.f32 %v1754, %v1841
    %v1843 = vpop.f32.mrf.mxu0
    %1844 = vmatprep.mubr.bf16.mxu0 0
    %1845 = vmatmul.mubr.bf16.gmra.mxu0 %v1745
    %v1846 = vpop.f32.mrf.mxu0
    %v1847 = vadd.f32 %v1754, %v1846
    %v1848 = vpop.f32.mrf.mxu0
    %v1849 = vpop.f32.mrf.mxu0
    %v1850 = vadd.f32 %v1754, %v1849
    %v1851 = vpop.f32.mrf.mxu0
    %1852 = vmatprep.mubr.bf16.mxu0 0
    %1853 = vmatmul.mubr.bf16.gmra.mxu0 %v1746
    %v1854 = vpop.f32.mrf.mxu0
    %v1855 = vadd.f32 %v1754, %v1854
    %v1856 = vpop.f32.mrf.mxu0
    %v1857 = vpop.f32.mrf.mxu0
    %v1858 = vadd.f32 %v1754, %v1857
    %v1859 = vpop.f32.mrf.mxu0
    %1860 = vmatprep.mubr.bf16.mxu0 0
    %1861 = vmatmul.mubr.bf16.gmra.mxu0 %v1747
    %v1862 = vpop.f32.mrf.mxu0
    %v1863 = vadd.f32 %v1754, %v1862
    %v1864 = vpop.f32.mrf.mxu0
    %v1865 = vpop.f32.mrf.mxu0
    %v1866 = vadd.f32 %v1754, %v1865
    %v1867 = vpop.f32.mrf.mxu0
    %1868 = vdwg.mxu0
    %v1869 = vmax.f32 %v1839, 0.0
    %v1870 = vmax.f32 %v1842, 0.0
    %v1871 = vmax.f32 %v1847, 0.0
    %v1872 = vmax.f32 %v1850, 0.0
    %v1873 = vmax.f32 %v1855, 0.0
    %v1874 = vmax.f32 %v1858, 0.0
    %v1875 = vmax.f32 %v1863, 0.0
    %v1876 = vmax.f32 %v1866, 0.0
    %s1877 = scalar_lea.vmem [#allocation2], 320
    %v1878 = vld [vmem:[%s1877] sm:$0xf]
    %v1879 = vld [vmem:[%s1877 + $0x4] sm:$0xf]
    %v1880 = vld [vmem:[%s1877 + $0x8] sm:$0xf]
    %v1881 = vld [vmem:[%s1877 + $0xc] sm:$0xf]
    %v1882 = vld [vmem:[%s1877 + $0x10] sm:$0xf]
    %v1883 = vld [vmem:[%s1877 + $0x14] sm:$0xf]
    %v1884 = vld [vmem:[%s1877 + $0x18] sm:$0xf]
    %v1885 = vld [vmem:[%s1877 + $0x1c] sm:$0xf]
    %v1886 = vld [vmem:[%s1877 + $0x20] sm:$0xf]
    %v1887 = vld [vmem:[%s1877 + $0x24] sm:$0xf]
    %v1888 = vld [vmem:[%s1877 + $0x28] sm:$0xf]
    %v1889 = vld [vmem:[%s1877 + $0x2c] sm:$0xf]
    %v1890 = vld [vmem:[%s1877 + $0x30] sm:$0xf]
    %v1891 = vld [vmem:[%s1877 + $0x34] sm:$0xf]
    %v1892 = vld [vmem:[%s1877 + $0x38] sm:$0xf]
    %v1893 = vld [vmem:[%s1877 + $0x3c] sm:$0xf]
    %v1894 = vpack.c.bf16 %v1870, %v1869
    %v1895 = vpack.c.bf16 %v1872, %v1871
    %v1896 = vpack.c.bf16 %v1874, %v1873
    %v1897 = vpack.c.bf16 %v1876, %v1875
    %s1898 = scalar_lea.vmem %s6, 6
    %v1899 = vld [vmem:[%s1898] sm:$0x1]
    %v1901 = vlaneseq
    %v1902 = vshrl.u32 %v1901, 7
    %v1903 = vsub.s32 0, %v1902
    %v1904 = vrot.slane %v1899, %v1903
    %v1922 = vunpack.c.l.b16 %v1878
    %v1923 = vunpack.c.l.b16 %v1879
    %v1924 = vunpack.c.l.b16 %v1880
    %v1925 = vunpack.c.l.b16 %v1881
    %v1926 = vunpack.c.l.b16 %v1882
    %v1927 = vunpack.c.l.b16 %v1883
    %v1928 = vunpack.c.l.b16 %v1884
    %v1929 = vunpack.c.l.b16 %v1885
    %v1930 = vunpack.c.l.b16 %v1886
    %v1931 = vunpack.c.l.b16 %v1887
    %v1932 = vunpack.c.l.b16 %v1888
    %v1933 = vunpack.c.l.b16 %v1889
    %v1934 = vunpack.c.l.b16 %v1890
    %v1935 = vunpack.c.l.b16 %v1891
    %v1936 = vunpack.c.l.b16 %v1892
    %v1937 = vunpack.c.l.b16 %v1893
    %v1938 = vpack.c.b16 %v1923, %v1922
    %v1939 = vpack.c.b16 %v1925, %v1924
    %v1940 = vpack.c.b16 %v1927, %v1926
    %v1941 = vpack.c.b16 %v1929, %v1928
    %v1942 = vpack.c.b16 %v1931, %v1930
    %v1943 = vpack.c.b16 %v1933, %v1932
    %v1944 = vpack.c.b16 %v1935, %v1934
    %v1945 = vpack.c.b16 %v1937, %v1936
    %1954 = vmatprep.subr.bf16.mxu0 0
    %1955 = vmatpush1.bf16.msra.mxu0 %v1945
    %1956 = vmatprep.subr.bf16.mxu0 0
    %1957 = vmatpush1.bf16.msra.mxu0 %v1944
    %1958 = vmatprep.subr.bf16.mxu0 0
    %1959 = vmatpush1.bf16.msra.mxu0 %v1943
    %1960 = vmatprep.subr.bf16.mxu0 0
    %1961 = vmatpush1.bf16.msra.mxu0 %v1942
    %1962 = vmatprep.subr.bf16.mxu0 0
    %1963 = vmatpush1.bf16.msra.mxu0 %v1941
    %1964 = vmatprep.subr.bf16.mxu0 0
    %1965 = vmatpush1.bf16.msra.mxu0 %v1940
    %1966 = vmatprep.subr.bf16.mxu0 0
    %1967 = vmatpush1.bf16.msra.mxu0 %v1939
    %1968 = vmatprep.subr.bf16.mxu0 0
    %1969 = vmatpush1.bf16.msra.mxu0 %v1938
    %1970 = vmatprep.subr.bf16.mxu0 0
    %1971 = vmatpush2.bf16.msra.mxu0 0
    %1972 = vmatprep.subr.bf16.mxu0 0
    %1973 = vmatpush2.bf16.msra.mxu0 0
    %1974 = vmatprep.subr.bf16.mxu0 0
    %1975 = vmatpush2.bf16.msra.mxu0 0
    %1976 = vmatprep.subr.bf16.mxu0 0
    %1977 = vmatpush2.bf16.msra.mxu0 0
    %1978 = vmatprep.subr.bf16.mxu0 0
    %1979 = vmatpush2.bf16.msra.mxu0 0
    %1980 = vmatprep.subr.bf16.mxu0 0
    %1981 = vmatpush2.bf16.msra.mxu0 0
    %1982 = vmatprep.subr.bf16.mxu0 0
    %1983 = vmatpush2.bf16.msra.mxu0 0
    %1984 = vmatprep.subr.bf16.mxu0 0
    %1985 = vmatpush2.bf16.msra.mxu0 0
    %1986 = vmatprep.mubr.bf16.mxu0 0
    %1987 = vmatmul.mubr.bf16.gmra.mxu0 %v1894
    %v1988 = vpop.f32.mrf.mxu0
    %v1989 = vadd.f32 %v1904, %v1988
    %v1990 = vpop.f32.mrf.mxu0
    %v1991 = vpop.f32.mrf.mxu0
    %v1992 = vadd.f32 %v1904, %v1991
    %v1993 = vpop.f32.mrf.mxu0
    %1994 = vmatprep.mubr.bf16.mxu0 0
    %1995 = vmatmul.mubr.bf16.gmra.mxu0 %v1895
    %v1996 = vpop.f32.mrf.mxu0
    %v1997 = vadd.f32 %v1904, %v1996
    %v1998 = vpop.f32.mrf.mxu0
    %v1999 = vpop.f32.mrf.mxu0
    %v2000 = vadd.f32 %v1904, %v1999
    %v2001 = vpop.f32.mrf.mxu0
    %2002 = vmatprep.mubr.bf16.mxu0 0
    %2003 = vmatmul.mubr.bf16.gmra.mxu0 %v1896
    %v2004 = vpop.f32.mrf.mxu0
    %v2005 = vadd.f32 %v1904, %v2004
    %v2006 = vpop.f32.mrf.mxu0
    %v2007 = vpop.f32.mrf.mxu0
    %v2008 = vadd.f32 %v1904, %v2007
    %v2009 = vpop.f32.mrf.mxu0
    %2010 = vmatprep.mubr.bf16.mxu0 0
    %2011 = vmatmul.mubr.bf16.gmra.mxu0 %v1897
    %v2012 = vpop.f32.mrf.mxu0
    %v2013 = vadd.f32 %v1904, %v2012
    %v2014 = vpop.f32.mrf.mxu0
    %v2015 = vpop.f32.mrf.mxu0
    %v2016 = vadd.f32 %v1904, %v2015
    %v2017 = vpop.f32.mrf.mxu0
    %2018 = vdwg.mxu0
    %vm2019 = vcmp.gt.f32.partialorder %v1989, 0.0
    %vm2020 = vcmp.gt.f32.partialorder %v1992, 0.0
    %vm2021 = vcmp.gt.f32.partialorder %v1997, 0.0
    %vm2022 = vcmp.gt.f32.partialorder %v2000, 0.0
    %vm2023 = vcmp.gt.f32.partialorder %v2005, 0.0
    %vm2024 = vcmp.gt.f32.partialorder %v2008, 0.0
    %vm2025 = vcmp.gt.f32.partialorder %v2013, 0.0
    %vm2026 = vcmp.gt.f32.partialorder %v2016, 0.0
    %v2027 = vmul.f32 %v1989, 0.1
    %v2028 = vmul.f32 %v1992, 0.1
    %v2029 = vmul.f32 %v1997, 0.1
    %v2030 = vmul.f32 %v2000, 0.1
    %v2031 = vmul.f32 %v2005, 0.1
    %v2032 = vmul.f32 %v2008, 0.1
    %v2033 = vmul.f32 %v2013, 0.1
    %v2034 = vmul.f32 %v2016, 0.1
    %v2035 = vsel %vm2019, %v1989, %v2027
    %v2036 = vsel %vm2020, %v1992, %v2028
    %v2037 = vsel %vm2021, %v1997, %v2029
    %v2038 = vsel %vm2022, %v2000, %v2030
    %v2039 = vsel %vm2023, %v2005, %v2031
    %v2040 = vsel %vm2024, %v2008, %v2032
    %v2041 = vsel %vm2025, %v2013, %v2033
    %v2042 = vsel %vm2026, %v2016, %v2034
    %v2043 = vpack.c.bf16 %v2036, %v2035
    %v2044 = vpack.c.bf16 %v2038, %v2037
    %v2045 = vpack.c.bf16 %v2040, %v2039
    %v2046 = vpack.c.bf16 %v2042, %v2041
    %2047 = vmatprep.subr.bf16.mxu0 0
    %2048 = vmatpush1.bf16.msra.mxu0 0
    %2049 = vmatprep.subr.bf16.mxu0 0
    %2050 = vmatpush1.bf16.msra.mxu0 0
    %2051 = vmatprep.subr.bf16.mxu0 0
    %2052 = vmatpush1.bf16.msra.mxu0 0
    %2053 = vmatprep.subr.bf16.mxu0 0
    %2054 = vmatpush1.bf16.msra.mxu0 0
    %2055 = vmatprep.subr.bf16.mxu0 0
    %2056 = vmatpush1.bf16.msra.mxu0 %v2046
    %2057 = vmatprep.subr.bf16.mxu0 0
    %2058 = vmatpush1.bf16.msra.mxu0 %v2045
    %2059 = vmatprep.subr.bf16.mxu0 0
    %2060 = vmatpush1.bf16.msra.mxu0 %v2044
    %2061 = vmatprep.subr.bf16.mxu0 0
    %2062 = vmatpush1.bf16.msra.mxu0 %v2043
    %2063 = vmatprep.subr.bf16.mxu0 0
    %2064 = vmatpush2.bf16.msra.mxu0 0
    %2065 = vmatprep.subr.bf16.mxu0 0
    %2066 = vmatpush2.bf16.msra.mxu0 0
    %2067 = vmatprep.subr.bf16.mxu0 0
    %2068 = vmatpush2.bf16.msra.mxu0 0
    %2069 = vmatprep.subr.bf16.mxu0 0
    %2070 = vmatpush2.bf16.msra.mxu0 0
    %2071 = vmatprep.subr.bf16.mxu0 0
    %2072 = vmatpush2.bf16.msra.mxu0 0
    %2073 = vmatprep.subr.bf16.mxu0 0
    %2074 = vmatpush2.bf16.msra.mxu0 0
    %2075 = vmatprep.subr.bf16.mxu0 0
    %2076 = vmatpush2.bf16.msra.mxu0 0
    %2077 = vmatprep.subr.bf16.mxu0 0
    %2078 = vmatpush2.bf16.msra.mxu0 0
    %2079 = vmatprep.mubr.bf16.mxu0 0
    %2080 = vmatmul.mubr.bf16.gmra.mxu0 %v579
    %v2081 = vpop.f32.mrf.mxu0
    %v2082 = vadd.f32 0.0, %v2081
    %v2083 = vpop.f32.mrf.mxu0
    %v2084 = vpop.f32.mrf.mxu0
    %v2085 = vpop.f32.mrf.mxu0
    %2086 = vdwg.mxu0
    %s2087 = scalar_lea.vmem [#allocation2], 640
    %v2088 = vld [vmem:[%s2087] sm:$0xf]
    %v2089 = vld [vmem:[%s2087 + $0x4] sm:$0xf]
    %v2090 = vld [vmem:[%s2087 + $0x8] sm:$0xf]
    %v2091 = vld [vmem:[%s2087 + $0xc] sm:$0xf]
    %v2092 = vld [vmem:[%s2087 + $0x10] sm:$0xf]
    %v2093 = vld [vmem:[%s2087 + $0x14] sm:$0xf]
    %v2094 = vld [vmem:[%s2087 + $0x18] sm:$0xf]
    %v2095 = vld [vmem:[%s2087 + $0x1c] sm:$0xf]
    %v2096 = vld [vmem:[%s2087 + $0x20] sm:$0xf]
    %v2097 = vld [vmem:[%s2087 + $0x24] sm:$0xf]
    %v2098 = vld [vmem:[%s2087 + $0x28] sm:$0xf]
    %v2099 = vld [vmem:[%s2087 + $0x2c] sm:$0xf]
    %v2100 = vld [vmem:[%s2087 + $0x30] sm:$0xf]
    %v2101 = vld [vmem:[%s2087 + $0x34] sm:$0xf]
    %v2102 = vld [vmem:[%s2087 + $0x38] sm:$0xf]
    %v2103 = vld [vmem:[%s2087 + $0x3c] sm:$0xf]
    %v2104 = vpack.c.bf16 %v2082, %v2082
    %s2105 = scalar_lea.vmem %s6, 11
    %v2106 = vld [vmem:[%s2105] sm:$0x1]
    %v2108 = vlaneseq
    %v2109 = vshrl.u32 %v2108, 7
    %v2110 = vsub.s32 0, %v2109
    %v2111 = vrot.slane %v2106, %v2110
    %v2129 = vunpack.c.l.b16 %v2088
    %v2130 = vunpack.c.l.b16 %v2089
    %v2131 = vunpack.c.l.b16 %v2090
    %v2132 = vunpack.c.l.b16 %v2091
    %v2133 = vunpack.c.l.b16 %v2092
    %v2134 = vunpack.c.l.b16 %v2093
    %v2135 = vunpack.c.l.b16 %v2094
    %v2136 = vunpack.c.l.b16 %v2095
    %v2137 = vunpack.c.l.b16 %v2096
    %v2138 = vunpack.c.l.b16 %v2097
    %v2139 = vunpack.c.l.b16 %v2098
    %v2140 = vunpack.c.l.b16 %v2099
    %v2141 = vunpack.c.l.b16 %v2100
    %v2142 = vunpack.c.l.b16 %v2101
    %v2143 = vunpack.c.l.b16 %v2102
    %v2144 = vunpack.c.l.b16 %v2103
    %v2145 = vpack.c.b16 %v2130, %v2129
    %v2146 = vpack.c.b16 %v2132, %v2131
    %v2147 = vpack.c.b16 %v2134, %v2133
    %v2148 = vpack.c.b16 %v2136, %v2135
    %v2149 = vpack.c.b16 %v2138, %v2137
    %v2150 = vpack.c.b16 %v2140, %v2139
    %v2151 = vpack.c.b16 %v2142, %v2141
    %v2152 = vpack.c.b16 %v2144, %v2143
    %2161 = vmatprep.subr.bf16.mxu0 0
    %2162 = vmatpush1.bf16.msra.mxu0 %v2152
    %2163 = vmatprep.subr.bf16.mxu0 0
    %2164 = vmatpush1.bf16.msra.mxu0 %v2151
    %2165 = vmatprep.subr.bf16.mxu0 0
    %2166 = vmatpush1.bf16.msra.mxu0 %v2150
    %2167 = vmatprep.subr.bf16.mxu0 0
    %2168 = vmatpush1.bf16.msra.mxu0 %v2149
    %2169 = vmatprep.subr.bf16.mxu0 0
    %2170 = vmatpush1.bf16.msra.mxu0 %v2148
    %2171 = vmatprep.subr.bf16.mxu0 0
    %2172 = vmatpush1.bf16.msra.mxu0 %v2147
    %2173 = vmatprep.subr.bf16.mxu0 0
    %2174 = vmatpush1.bf16.msra.mxu0 %v2146
    %2175 = vmatprep.subr.bf16.mxu0 0
    %2176 = vmatpush1.bf16.msra.mxu0 %v2145
    %2177 = vmatprep.subr.bf16.mxu0 0
    %2178 = vmatpush2.bf16.msra.mxu0 0
    %2179 = vmatprep.subr.bf16.mxu0 0
    %2180 = vmatpush2.bf16.msra.mxu0 0
    %2181 = vmatprep.subr.bf16.mxu0 0
    %2182 = vmatpush2.bf16.msra.mxu0 0
    %2183 = vmatprep.subr.bf16.mxu0 0
    %2184 = vmatpush2.bf16.msra.mxu0 0
    %2185 = vmatprep.subr.bf16.mxu0 0
    %2186 = vmatpush2.bf16.msra.mxu0 0
    %2187 = vmatprep.subr.bf16.mxu0 0
    %2188 = vmatpush2.bf16.msra.mxu0 0
    %2189 = vmatprep.subr.bf16.mxu0 0
    %2190 = vmatpush2.bf16.msra.mxu0 0
    %2191 = vmatprep.subr.bf16.mxu0 0
    %2192 = vmatpush2.bf16.msra.mxu0 0
    %2193 = vmatprep.mubr.bf16.mxu0 0
    %2194 = vmatmul.mubr.bf16.gmra.mxu0 %v2104
    %v2195 = vpop.f32.mrf.mxu0
    %v2196 = vadd.f32 %v2111, %v2195
    %v2197 = vpop.f32.mrf.mxu0
    %v2198 = vpop.f32.mrf.mxu0
    %v2199 = vpop.f32.mrf.mxu0
    %2200 = vdwg.mxu0
    %v2201 = vmax.f32 %v2196, 0.0
    %s2202 = scalar_lea.vmem [#allocation2], 704
    %v2203 = vld [vmem:[%s2202] sm:$0xf]
    %v2204 = vld [vmem:[%s2202 + $0x4] sm:$0xf]
    %v2205 = vld [vmem:[%s2202 + $0x8] sm:$0xf]
    %v2206 = vld [vmem:[%s2202 + $0xc] sm:$0xf]
    %v2207 = vld [vmem:[%s2202 + $0x10] sm:$0xf]
    %v2208 = vld [vmem:[%s2202 + $0x14] sm:$0xf]
    %v2209 = vld [vmem:[%s2202 + $0x18] sm:$0xf]
    %v2210 = vld [vmem:[%s2202 + $0x1c] sm:$0xf]
    %v2211 = vld [vmem:[%s2202 + $0x20] sm:$0xf]
    %v2212 = vld [vmem:[%s2202 + $0x24] sm:$0xf]
    %v2213 = vld [vmem:[%s2202 + $0x28] sm:$0xf]
    %v2214 = vld [vmem:[%s2202 + $0x2c] sm:$0xf]
    %v2215 = vld [vmem:[%s2202 + $0x30] sm:$0xf]
    %v2216 = vld [vmem:[%s2202 + $0x34] sm:$0xf]
    %v2217 = vld [vmem:[%s2202 + $0x38] sm:$0xf]
    %v2218 = vld [vmem:[%s2202 + $0x3c] sm:$0xf]
    %v2219 = vpack.c.bf16 %v2201, %v2201
    %s2220 = scalar_lea.vmem %s6, 12
    %v2221 = vld [vmem:[%s2220] sm:$0x1]
    %v2223 = vlaneseq
    %v2224 = vshrl.u32 %v2223, 7
    %v2225 = vsub.s32 0, %v2224
    %v2226 = vrot.slane %v2221, %v2225
    %v2244 = vunpack.c.l.b16 %v2203
    %v2245 = vunpack.c.l.b16 %v2204
    %v2246 = vunpack.c.l.b16 %v2205
    %v2247 = vunpack.c.l.b16 %v2206
    %v2248 = vunpack.c.l.b16 %v2207
    %v2249 = vunpack.c.l.b16 %v2208
    %v2250 = vunpack.c.l.b16 %v2209
    %v2251 = vunpack.c.l.b16 %v2210
    %v2252 = vunpack.c.l.b16 %v2211
    %v2253 = vunpack.c.l.b16 %v2212
    %v2254 = vunpack.c.l.b16 %v2213
    %v2255 = vunpack.c.l.b16 %v2214
    %v2256 = vunpack.c.l.b16 %v2215
    %v2257 = vunpack.c.l.b16 %v2216
    %v2258 = vunpack.c.l.b16 %v2217
    %v2259 = vunpack.c.l.b16 %v2218
    %v2260 = vpack.c.b16 %v2245, %v2244
    %v2261 = vpack.c.b16 %v2247, %v2246
    %v2262 = vpack.c.b16 %v2249, %v2248
    %v2263 = vpack.c.b16 %v2251, %v2250
    %v2264 = vpack.c.b16 %v2253, %v2252
    %v2265 = vpack.c.b16 %v2255, %v2254
    %v2266 = vpack.c.b16 %v2257, %v2256
    %v2267 = vpack.c.b16 %v2259, %v2258
    %2276 = vmatprep.subr.bf16.mxu0 0
    %2277 = vmatpush1.bf16.msra.mxu0 %v2267
    %2278 = vmatprep.subr.bf16.mxu0 0
    %2279 = vmatpush1.bf16.msra.mxu0 %v2266
    %2280 = vmatprep.subr.bf16.mxu0 0
    %2281 = vmatpush1.bf16.msra.mxu0 %v2265
    %2282 = vmatprep.subr.bf16.mxu0 0
    %2283 = vmatpush1.bf16.msra.mxu0 %v2264
    %2284 = vmatprep.subr.bf16.mxu0 0
    %2285 = vmatpush1.bf16.msra.mxu0 %v2263
    %2286 = vmatprep.subr.bf16.mxu0 0
    %2287 = vmatpush1.bf16.msra.mxu0 %v2262
    %2288 = vmatprep.subr.bf16.mxu0 0
    %2289 = vmatpush1.bf16.msra.mxu0 %v2261
    %2290 = vmatprep.subr.bf16.mxu0 0
    %2291 = vmatpush1.bf16.msra.mxu0 %v2260
    %2292 = vmatprep.subr.bf16.mxu0 0
    %2293 = vmatpush2.bf16.msra.mxu0 0
    %2294 = vmatprep.subr.bf16.mxu0 0
    %2295 = vmatpush2.bf16.msra.mxu0 0
    %2296 = vmatprep.subr.bf16.mxu0 0
    %2297 = vmatpush2.bf16.msra.mxu0 0
    %2298 = vmatprep.subr.bf16.mxu0 0
    %2299 = vmatpush2.bf16.msra.mxu0 0
    %2300 = vmatprep.subr.bf16.mxu0 0
    %2301 = vmatpush2.bf16.msra.mxu0 0
    %2302 = vmatprep.subr.bf16.mxu0 0
    %2303 = vmatpush2.bf16.msra.mxu0 0
    %2304 = vmatprep.subr.bf16.mxu0 0
    %2305 = vmatpush2.bf16.msra.mxu0 0
    %2306 = vmatprep.subr.bf16.mxu0 0
    %2307 = vmatpush2.bf16.msra.mxu0 0
    %2308 = vmatprep.mubr.bf16.mxu0 0
    %2309 = vmatmul.mubr.bf16.gmra.mxu0 %v2219
    %v2310 = vpop.f32.mrf.mxu0
    %v2311 = vadd.f32 %v2226, %v2310
    %v2312 = vpop.f32.mrf.mxu0
    %v2313 = vpop.f32.mrf.mxu0
    %v2314 = vpop.f32.mrf.mxu0
    %2315 = vdwg.mxu0
    %v2316 = vmax.f32 %v2311, 0.0
    %s2317 = scalar_lea.vmem [#allocation2], 768
    %v2318 = vld [vmem:[%s2317] sm:$0xf]
    %v2319 = vld [vmem:[%s2317 + $0x4] sm:$0xf]
    %v2320 = vld [vmem:[%s2317 + $0x8] sm:$0xf]
    %v2321 = vld [vmem:[%s2317 + $0xc] sm:$0xf]
    %v2322 = vld [vmem:[%s2317 + $0x10] sm:$0xf]
    %v2323 = vld [vmem:[%s2317 + $0x14] sm:$0xf]
    %v2324 = vld [vmem:[%s2317 + $0x18] sm:$0xf]
    %v2325 = vld [vmem:[%s2317 + $0x1c] sm:$0xf]
    %v2326 = vld [vmem:[%s2317 + $0x20] sm:$0xf]
    %v2327 = vld [vmem:[%s2317 + $0x24] sm:$0xf]
    %v2328 = vld [vmem:[%s2317 + $0x28] sm:$0xf]
    %v2329 = vld [vmem:[%s2317 + $0x2c] sm:$0xf]
    %v2330 = vld [vmem:[%s2317 + $0x30] sm:$0xf]
    %v2331 = vld [vmem:[%s2317 + $0x34] sm:$0xf]
    %v2332 = vld [vmem:[%s2317 + $0x38] sm:$0xf]
    %v2333 = vld [vmem:[%s2317 + $0x3c] sm:$0xf]
    %v2334 = vpack.c.bf16 %v2316, %v2316
    %s2335 = scalar_lea.vmem %s6, 13
    %v2336 = vld [vmem:[%s2335] sm:$0x1]
    %v2338 = vlaneseq
    %v2339 = vshrl.u32 %v2338, 7
    %v2340 = vsub.s32 0, %v2339
    %v2341 = vrot.slane %v2336, %v2340
    %v2359 = vunpack.c.l.b16 %v2318
    %v2360 = vunpack.c.l.b16 %v2319
    %v2361 = vunpack.c.l.b16 %v2320
    %v2362 = vunpack.c.l.b16 %v2321
    %v2363 = vunpack.c.l.b16 %v2322
    %v2364 = vunpack.c.l.b16 %v2323
    %v2365 = vunpack.c.l.b16 %v2324
    %v2366 = vunpack.c.l.b16 %v2325
    %v2367 = vunpack.c.l.b16 %v2326
    %v2368 = vunpack.c.l.b16 %v2327
    %v2369 = vunpack.c.l.b16 %v2328
    %v2370 = vunpack.c.l.b16 %v2329
    %v2371 = vunpack.c.l.b16 %v2330
    %v2372 = vunpack.c.l.b16 %v2331
    %v2373 = vunpack.c.l.b16 %v2332
    %v2374 = vunpack.c.l.b16 %v2333
    %v2375 = vpack.c.b16 %v2360, %v2359
    %v2376 = vpack.c.b16 %v2362, %v2361
    %v2377 = vpack.c.b16 %v2364, %v2363
    %v2378 = vpack.c.b16 %v2366, %v2365
    %v2379 = vpack.c.b16 %v2368, %v2367
    %v2380 = vpack.c.b16 %v2370, %v2369
    %v2381 = vpack.c.b16 %v2372, %v2371
    %v2382 = vpack.c.b16 %v2374, %v2373
    %2391 = vmatprep.subr.bf16.mxu0 0
    %2392 = vmatpush1.bf16.msra.mxu0 %v2382
    %2393 = vmatprep.subr.bf16.mxu0 0
    %2394 = vmatpush1.bf16.msra.mxu0 %v2381
    %2395 = vmatprep.subr.bf16.mxu0 0
    %2396 = vmatpush1.bf16.msra.mxu0 %v2380
    %2397 = vmatprep.subr.bf16.mxu0 0
    %2398 = vmatpush1.bf16.msra.mxu0 %v2379
    %2399 = vmatprep.subr.bf16.mxu0 0
    %2400 = vmatpush1.bf16.msra.mxu0 %v2378
    %2401 = vmatprep.subr.bf16.mxu0 0
    %2402 = vmatpush1.bf16.msra.mxu0 %v2377
    %2403 = vmatprep.subr.bf16.mxu0 0
    %2404 = vmatpush1.bf16.msra.mxu0 %v2376
    %2405 = vmatprep.subr.bf16.mxu0 0
    %2406 = vmatpush1.bf16.msra.mxu0 %v2375
    %2407 = vmatprep.subr.bf16.mxu0 0
    %2408 = vmatpush2.bf16.msra.mxu0 0
    %2409 = vmatprep.subr.bf16.mxu0 0
    %2410 = vmatpush2.bf16.msra.mxu0 0
    %2411 = vmatprep.subr.bf16.mxu0 0
    %2412 = vmatpush2.bf16.msra.mxu0 0
    %2413 = vmatprep.subr.bf16.mxu0 0
    %2414 = vmatpush2.bf16.msra.mxu0 0
    %2415 = vmatprep.subr.bf16.mxu0 0
    %2416 = vmatpush2.bf16.msra.mxu0 0
    %2417 = vmatprep.subr.bf16.mxu0 0
    %2418 = vmatpush2.bf16.msra.mxu0 0
    %2419 = vmatprep.subr.bf16.mxu0 0
    %2420 = vmatpush2.bf16.msra.mxu0 0
    %2421 = vmatprep.subr.bf16.mxu0 0
    %2422 = vmatpush2.bf16.msra.mxu0 0
    %2423 = vmatprep.mubr.bf16.mxu0 0
    %2424 = vmatmul.mubr.bf16.gmra.mxu0 %v2334
    %v2425 = vpop.f32.mrf.mxu0
    %v2426 = vadd.f32 %v2341, %v2425
    %v2427 = vpop.f32.mrf.mxu0
    %v2428 = vpop.f32.mrf.mxu0
    %v2429 = vpop.f32.mrf.mxu0
    %2430 = vdwg.mxu0
    %2431 = vst [vmem:[#allocation5] sm:$0xff] %v2426
    // Predicated region
    $region34: #{tpu_custom_call.1} parent=1 // pred_check
      _
    $region35: #{tpu_custom_call.1} parent=1 // pred_check_branch
      %2433 = sbr.rel (0) target = $region37
    $region36: #{tpu_custom_call.1} parent=1 // pred_region
      %s2435 = ssub.s32 128, 128
      %2436 = vsyncadd [#allocation4], %s2435
      %s2438 = sshll.u32 [#allocation5], 4
      %s2439 = int_to_ptr.vmem [resolvable:$true] %s2438
      %2441 = dma.vmem_to_hbm [thread:$0]  %s2439, 128, %s7, [#allocation4]
    $region37: #{tpu_custom_call.1} parent=1 // pred_fallthru
      _
    // Predicated region
    $region38: #{tpu_custom_call.1} parent=1 // pred_check
      _
    $region39: #{tpu_custom_call.1} parent=1 // pred_check_branch
      %2443 = sbr.rel (0) target = $region41
    $region40: #{tpu_custom_call.1} parent=1 // pred_region
      %2444 = dma.done [#allocation4], 128
    $region41: #{tpu_custom_call.1} parent=1 // pred_fallthru
      _
    %2445 = vsyncpa [#allocation3], 1
    %2446 = vsyncpa [#allocation4], 1

</llo_original>
